<compile_context>
chip_gen: v6e
topology: v6e:2x2x1
jax: 0.10.0
libtpu: 0.0.40
codegen_flags: <defaults>
</compile_context>

<pallas_src>
import functools

import jax
import jax.numpy as jnp
from jax.experimental import pallas as pl
from jax.experimental.pallas import tpu as pltpu


def _update_painn_kernel(s_ref, v_ref, wuv_ref, wup_ref, w2_ref, bias_ref,
                         out_ref):
    f32 = jnp.float32
    t, f = s_ref.shape                         # static tile_n, num_feat
    mxu_dtype = wuv_ref.dtype                  # bf16 on the perf path, f32 else

    # (3, T, F) -> (3T, F): zero-cost relayout (avoids three separate loads
    # plus a sublane concat that materialized extra VMEM copies).
    v_all = v_ref[...].reshape(3 * t, f)

    # ---- fused U/V projection: ONE (3T, F) @ (F, 2F) MXU op ----------------
    uv_all = jnp.dot(v_all.astype(mxu_dtype), wuv_ref[...],
                     preferred_element_type=f32)           # (3T, 2F), f32 acc
    u_all = uv_all[:, :f]                      # U for x/y/z stacked on rows
    vp_all = uv_all[:, f:]                     # V for x/y/z stacked on rows

    prod = u_all * vp_all
    uv = prod[0:t] + prod[t:2 * t] + prod[2 * t:3 * t]        # Σ_c U_c * V_c
    sq = vp_all * vp_all
    n_v = jnp.sqrt(sq[0:t] + sq[t:2 * t] + sq[2 * t:3 * t])   # ||V|| over c

    bias = bias_ref[...]                       # (1, 4F), f32
    b_up = bias[:, :f]
    b2 = bias[:, f:]                           # [b_top | b_mid | b_bot]

    # ---- lin_up(cat([s, nV])) + silu : ONE (T, 2F) @ (2F, F) matmul --------
    s_nv = jnp.concatenate([s_ref[...].astype(f32), n_v], axis=-1)   # (T, 2F)
    pre = jnp.dot(s_nv.astype(mxu_dtype), wup_ref[...],
                  preferred_element_type=f32) + b_up
    a = pre * jax.nn.sigmoid(pre)              # silu (EUP)

    # ---- lin2 -> [top | mid | bot] : ONE (T, F) @ (F, 3F) matmul -----------
    tmb = jnp.dot(a.astype(mxu_dtype), w2_ref[...],
                  preferred_element_type=f32) + b2
    top = tmb[:, :f]
    mid = tmb[:, f:2 * f]
    bot = tmb[:, 2 * f:]

    dsu = mid * uv + bot
    v_f32 = v_all.astype(f32)                  # full-precision v for dvu
    # lane-dense packed output: [dsu | dvu_x | dvu_y | dvu_z] -> (T, 4F=128)
    out_ref[...] = jnp.concatenate(
        [dsu,
         v_f32[0:t] * top,
         v_f32[t:2 * t] * top,
         v_f32[2 * t:3 * t] * top], axis=-1).astype(out_ref.dtype)


def _pick_tile(n, requested):
    """Largest multiple-of-8 divisor of n that is <= requested, preferring
    >= 8 grid steps (>= 4 per TensorCore on a 2-TC megacore), then >= 2."""
    cands = [t for t in range(8, min(requested, n) + 1, 8) if n % t == 0]
    if not cands:
        return n                               # single full-extent block
    for min_steps in (8, 2, 1):
        ok = [t for t in cands if n // t >= min_steps]
        if ok:
            return max(ok)
    return max(cands)


@functools.partial(jax.jit, static_argnames=("tile_n", "out_dtype"))
def update_painn(s, v3, params, *, tile_n=4096, out_dtype=None):
    """s: (N, F) scalar features; v3: (3, N, F) vector features.

    Returns a lane-dense packed (N, 4F) array laid out as
    [dsu | dvu_x | dvu_y | dvu_z].  Inputs may be f32 or bf16; matmuls run at
    the packed-weight dtype (bf16 recommended) with f32 accumulation.
    """
    n, f = s.shape
    assert v3.shape == (3, n, f)
    wuv, wup, w2k, bias = params
    assert wuv.shape == (f, 2 * f) and wup.shape == (2 * f, f)
    assert w2k.shape == (f, 3 * f) and bias.shape == (1, 4 * f)

    out_dtype = jnp.dtype(s.dtype if out_dtype is None else out_dtype)

    # VMEM budgeting: double-buffered s/v/out tiles plus headroom for the
    # fused f32 intermediates (uv_all, tmb, concats, ...).  Keep well under
    # v7x's 64 MiB/TC; raise the scoped limit explicitly for v5e/v6e defaults.
    row_io = (f * jnp.dtype(s.dtype).itemsize
              + 3 * f * jnp.dtype(v3.dtype).itemsize
              + 4 * f * out_dtype.itemsize)
    per_row = 2 * row_io + 14 * f * 4          # double-buffered I/O + scratch
    vmem_budget = 40 << 20
    cap = max(8, (vmem_budget // per_row) // 8 * 8)

    tile_n = _pick_tile(n, min(tile_n, cap))
    grid = (n // tile_n,)
    vmem_limit = int(min(max(2 * per_row * tile_n, 32 << 20), 48 << 20))

    row_spec = pl.BlockSpec((tile_n, f), lambda i: (i, 0))
    v_spec = pl.BlockSpec((3, tile_n, f), lambda i: (0, i, 0))
    out_spec = pl.BlockSpec((tile_n, 4 * f), lambda i: (i, 0))

    def const(shape):
        return pl.BlockSpec(shape, lambda i: (0, 0))

    return pl.pallas_call(
        _update_painn_kernel,
        out_shape=jax.ShapeDtypeStruct((n, 4 * f), out_dtype),
        grid_spec=pltpu.PrefetchScalarGridSpec(
            num_scalar_prefetch=0,
            grid=grid,
            in_specs=[
                row_spec,                # s
                v_spec,                  # v (3, N, F)
                const((f, 2 * f)),       # [Wu^T | Wv^T]
                const((2 * f, f)),       # W_up^T
                const((f, 3 * f)),       # W2^T -> [top|mid|bot]
                const((1, 4 * f)),       # [b_up | b_top | b_mid | b_bot]
            ],
            out_specs=out_spec,
        ),
        compiler_params=pltpu.CompilerParams(
            dimension_semantics=("parallel",),
            vmem_limit_bytes=vmem_limit),
    )(s, v3, wuv, wup, w2k, bias)


def init_params(key, num_feat):
    """Deterministic synthetic parameters matching the torch module shapes.

    torch shapes:
      lin_up.weight (F, 2F), lin_up.bias (F,)
      denseU.weight (F, F), denseV.weight (F, F)   (no bias)
      lin2.weight  (3F, F), lin2.bias  (3F,)
    """
    f = num_feat
    ks = jax.random.split(key, 6)
    sc = 0.1
    wu = sc * jax.random.normal(ks[0], (f, f), jnp.float32)        # denseU.weight
    wv = sc * jax.random.normal(ks[1], (f, f), jnp.float32)        # denseV.weight
    w_up = sc * jax.random.normal(ks[2], (f, 2 * f), jnp.float32)  # lin_up.weight
    b_up = sc * jax.random.normal(ks[3], (f,), jnp.float32)
    w2 = sc * jax.random.normal(ks[4], (3 * f, f), jnp.float32)    # lin2.weight
    b2 = sc * jax.random.normal(ks[5], (3 * f,), jnp.float32)
    return (wu, wv, w_up, b_up, w2, b2)                            # torch layout


def pack_params(raw, mxu_dtype=jnp.bfloat16):
    """Pack torch-layout weights into the 4 fused kernel operands.

    Weights are cast to `mxu_dtype` (bf16 recommended: f32 MXU matmuls are
    multi-pass and K is only 32/64 here); bias stays f32 (added post-acc).
    """
    wu, wv, w_up, b_up, w2, b2 = raw
    f = wu.shape[0]
    return (
        jnp.concatenate([wu.T, wv.T], axis=1).astype(mxu_dtype),   # (F, 2F)
        w_up.T.astype(mxu_dtype),                                  # (2F, F)
        w2.T.astype(mxu_dtype),                                    # (F, 3F)
        jnp.concatenate([b_up, b2]).reshape(1, 4 * f).astype(jnp.float32),
    )


def reference_forward(s, v, raw, num_feat):
    """Direct transliteration of the torch forward in plain JAX (f32).

    v is in torch layout (N, F, 3).
    """
    wu, wv, w_up, b_up, w2, b2 = raw
    n, f, _ = v.shape
    v_u = v.reshape(n, f, 3)
    v_ut = jnp.transpose(v_u, (0, 2, 1))                # (N, 3, F)
    U = jnp.transpose(v_ut @ wu.T, (0, 2, 1))           # (N, F, 3)
    V = jnp.transpose(v_ut @ wv.T, (0, 2, 1))           # (N, F, 3)
    UV = jnp.einsum('ijk,ijk->ij', U, V)
    nV = jnp.linalg.norm(V, axis=-1)
    s_u = jnp.concatenate([s, nV], axis=-1) @ w_up.T + b_up
    s_u = jax.nn.silu(s_u)
    s_u = s_u @ w2.T + b2
    top, middle, bottom = (s_u[:, :num_feat], s_u[:, num_feat:2 * num_feat],
                           s_u[:, 2 * num_feat:])
    dvu = jnp.einsum('ijk,ij->ijk', v_u, top)
    dsu = middle * UV + bottom
    return dsu, dvu


if __name__ == "__main__":
    NUM_NODES = 512    # N (small demo; tile picker -> tile_n=64, grid=8)
    NUM_FEAT = 32      # F (== out_channels so cat([s, nV]) has width 2F)

    key = jax.random.PRNGKey(0)
    k_s, k_v, k_p = jax.random.split(key, 3)
    s = jax.random.normal(k_s, (NUM_NODES, NUM_FEAT), jnp.float32)
    # model-native vector layout (3, N, F): no transposes on the kernel path.
    v3 = jax.random.normal(k_v, (3, NUM_NODES, NUM_FEAT), jnp.float32)

    raw = init_params(k_p, NUM_FEAT)

    # ---- pure-JAX transliteration of torch forward (torch (N, F, 3)) -------
    v_torch = jnp.transpose(v3, (1, 2, 0))              # ref only
    dsu_ref, dvu_ref = reference_forward(s, v_torch, raw, NUM_FEAT)

    def check(packed, atol, rtol):
        dsu = packed[:, :NUM_FEAT].astype(jnp.float32)
        assert dsu.shape == (NUM_NODES, NUM_FEAT)
        assert jnp.allclose(dsu, dsu_ref, atol=atol, rtol=rtol)
        for c in range(3):
            dvu_c = packed[:, NUM_FEAT * (c + 1):
                           NUM_FEAT * (c + 2)].astype(jnp.float32)
            assert jnp.allclose(dvu_c, dvu_ref[:, :, c], atol=atol, rtol=rtol)

    # exact-math path (f32 MXU operands): tight tolerance
    out_f32 = update_painn(s, v3, pack_params(raw, jnp.float32))
    jax.block_until_ready(out_f32)
    check(out_f32, atol=1e-4, rtol=1e-4)

    # perf path (bf16 MXU operands, f32 accumulation): bf16-level tolerance
    out_bf = update_painn(s, v3, pack_params(raw, jnp.bfloat16))
    jax.block_until_ready(out_bf)
    check(out_bf, atol=5e-2, rtol=5e-2)

    print("KERNEL_OK")
</pallas_src>

<mosaic_0001>
module attributes {stable_mosaic.version = 11 : i64} {
  func.func @_update_painn_kernel(%arg0: i32, %arg1: memref<64x32xf32, #tpu.memory_space<vmem>>, %arg2: memref<3x64x32xf32, #tpu.memory_space<vmem>>, %arg3: memref<32x64xf32, #tpu.memory_space<vmem>>, %arg4: memref<64x32xf32, #tpu.memory_space<vmem>>, %arg5: memref<32x96xf32, #tpu.memory_space<vmem>>, %arg6: memref<1x128xf32, #tpu.memory_space<vmem>>, %arg7: memref<64x128xf32, #tpu.memory_space<vmem>>) attributes {dimension_semantics = [#tpu.dimension_semantics<parallel>], iteration_bounds = array<i64: 8>, scalar_prefetch = 0 : i64, scratch_operands = 0 : i64, tpu.core_type = #tpu.core_type<tc>, window_params = [{transform_indices = @transform_0, window_bounds = array<i64: 64, 32>}, {transform_indices = @transform_1, window_bounds = array<i64: 3, 64, 32>}, {pipeline_mode = #tpu.pipeline_mode<synchronous>, transform_indices = @transform_2, window_bounds = array<i64: 32, 64>}, {pipeline_mode = #tpu.pipeline_mode<synchronous>, transform_indices = @transform_3, window_bounds = array<i64: 64, 32>}, {pipeline_mode = #tpu.pipeline_mode<synchronous>, transform_indices = @transform_4, window_bounds = array<i64: 32, 96>}, {pipeline_mode = #tpu.pipeline_mode<synchronous>, transform_indices = @transform_5, window_bounds = array<i64: 1, 128>}, {transform_indices = @transform_6, window_bounds = array<i64: 64, 128>}]} {
    %c0 = arith.constant 0 : index
    %c0_0 = arith.constant 0 : index
    %c0_1 = arith.constant 0 : index
    %0 = vector.load %arg2[%c0, %c0_0, %c0_1] : memref<3x64x32xf32, #tpu.memory_space<vmem>>, vector<3x64x32xf32>
    %1 = vector.shape_cast %0 : vector<3x64x32xf32> to vector<192x32xf32>
    %c0_2 = arith.constant 0 : index
    %c0_3 = arith.constant 0 : index
    %2 = vector.load %arg3[%c0_2, %c0_3] : memref<32x64xf32, #tpu.memory_space<vmem>>, vector<32x64xf32>
    %cst = arith.constant dense<0.000000e+00> : vector<192x64xf32>
    %3 = tpu.matmul %1, %2, %cst {dimension_numbers = #tpu.dot_dimension_numbers<[1], [0], [0], [1], [0, 0, 1, 1], [], []>} : vector<192x32xf32>, vector<32x64xf32>, vector<192x64xf32> -> vector<192x64xf32>
    %4 = vector.extract_strided_slice %3 {offsets = [0, 0], sizes = [192, 32], strides = [1, 1]} : vector<192x64xf32> to vector<192x32xf32>
    %5 = vector.extract_strided_slice %3 {offsets = [0, 32], sizes = [192, 32], strides = [1, 1]} : vector<192x64xf32> to vector<192x32xf32>
    %6 = arith.mulf %4, %5 : vector<192x32xf32>
    %7 = vector.extract_strided_slice %6 {offsets = [0, 0], sizes = [64, 32], strides = [1, 1]} : vector<192x32xf32> to vector<64x32xf32>
    %8 = vector.extract_strided_slice %6 {offsets = [64, 0], sizes = [64, 32], strides = [1, 1]} : vector<192x32xf32> to vector<64x32xf32>
    %9 = arith.addf %7, %8 : vector<64x32xf32>
    %10 = vector.extract_strided_slice %6 {offsets = [128, 0], sizes = [64, 32], strides = [1, 1]} : vector<192x32xf32> to vector<64x32xf32>
    %11 = arith.addf %9, %10 : vector<64x32xf32>
    %12 = arith.mulf %5, %5 : vector<192x32xf32>
    %13 = vector.extract_strided_slice %12 {offsets = [0, 0], sizes = [64, 32], strides = [1, 1]} : vector<192x32xf32> to vector<64x32xf32>
    %14 = vector.extract_strided_slice %12 {offsets = [64, 0], sizes = [64, 32], strides = [1, 1]} : vector<192x32xf32> to vector<64x32xf32>
    %15 = arith.addf %13, %14 : vector<64x32xf32>
    %16 = vector.extract_strided_slice %12 {offsets = [128, 0], sizes = [64, 32], strides = [1, 1]} : vector<192x32xf32> to vector<64x32xf32>
    %17 = arith.addf %15, %16 : vector<64x32xf32>
    %18 = math.sqrt %17 : vector<64x32xf32>
    %c0_4 = arith.constant 0 : index
    %c0_5 = arith.constant 0 : index
    %19 = vector.load %arg6[%c0_4, %c0_5] : memref<1x128xf32, #tpu.memory_space<vmem>>, vector<1x128xf32>
    %20 = vector.extract_strided_slice %19 {offsets = [0, 0], sizes = [1, 32], strides = [1, 1]} : vector<1x128xf32> to vector<1x32xf32>
    %21 = vector.extract_strided_slice %19 {offsets = [0, 32], sizes = [1, 96], strides = [1, 1]} : vector<1x128xf32> to vector<1x96xf32>
    %c0_6 = arith.constant 0 : index
    %c0_7 = arith.constant 0 : index
    %22 = vector.load %arg1[%c0_6, %c0_7] : memref<64x32xf32, #tpu.memory_space<vmem>>, vector<64x32xf32>
    %23 = tpu.concatenate %22, %18 in 1 : vector<64x32xf32>, vector<64x32xf32> -> vector<64x64xf32>
    %c0_8 = arith.constant 0 : index
    %c0_9 = arith.constant 0 : index
    %24 = vector.load %arg4[%c0_8, %c0_9] : memref<64x32xf32, #tpu.memory_space<vmem>>, vector<64x32xf32>
    %cst_10 = arith.constant dense<0.000000e+00> : vector<64x32xf32>
    %25 = tpu.matmul %23, %24, %cst_10 {dimension_numbers = #tpu.dot_dimension_numbers<[1], [0], [0], [1], [0, 0, 1, 1], [], []>} : vector<64x64xf32>, vector<64x32xf32>, vector<64x32xf32> -> vector<64x32xf32>
    %26 = vector.broadcast %20 : vector<1x32xf32> to vector<64x32xf32>
    %27 = arith.addf %25, %26 : vector<64x32xf32>
    %28 = arith.negf %27 : vector<64x32xf32>
    %29 = math.exp %28 : vector<64x32xf32>
    %cst_11 = arith.constant 1.000000e+00 : f32
    %30 = vector.broadcast %cst_11 : f32 to vector<64x32xf32>
    %31 = arith.addf %30, %29 : vector<64x32xf32>
    %32 = arith.divf %30, %31 : vector<64x32xf32>
    %33 = arith.mulf %27, %32 : vector<64x32xf32>
    %c0_12 = arith.constant 0 : index
    %c0_13 = arith.constant 0 : index
    %34 = vector.load %arg5[%c0_12, %c0_13] : memref<32x96xf32, #tpu.memory_space<vmem>>, vector<32x96xf32>
    %cst_14 = arith.constant dense<0.000000e+00> : vector<64x96xf32>
    %35 = tpu.matmul %33, %34, %cst_14 {dimension_numbers = #tpu.dot_dimension_numbers<[1], [0], [0], [1], [0, 0, 1, 1], [], []>} : vector<64x32xf32>, vector<32x96xf32>, vector<64x96xf32> -> vector<64x96xf32>
    %36 = vector.broadcast %21 : vector<1x96xf32> to vector<64x96xf32>
    %37 = arith.addf %35, %36 : vector<64x96xf32>
    %38 = vector.extract_strided_slice %37 {offsets = [0, 0], sizes = [64, 32], strides = [1, 1]} : vector<64x96xf32> to vector<64x32xf32>
    %39 = vector.extract_strided_slice %37 {offsets = [0, 32], sizes = [64, 32], strides = [1, 1]} : vector<64x96xf32> to vector<64x32xf32>
    %40 = vector.extract_strided_slice %37 {offsets = [0, 64], sizes = [64, 32], strides = [1, 1]} : vector<64x96xf32> to vector<64x32xf32>
    %41 = arith.mulf %39, %11 : vector<64x32xf32>
    %42 = arith.addf %41, %40 : vector<64x32xf32>
    %43 = vector.extract_strided_slice %1 {offsets = [0, 0], sizes = [64, 32], strides = [1, 1]} : vector<192x32xf32> to vector<64x32xf32>
    %44 = arith.mulf %43, %38 : vector<64x32xf32>
    %45 = vector.extract_strided_slice %1 {offsets = [64, 0], sizes = [64, 32], strides = [1, 1]} : vector<192x32xf32> to vector<64x32xf32>
    %46 = arith.mulf %45, %38 : vector<64x32xf32>
    %47 = vector.extract_strided_slice %1 {offsets = [128, 0], sizes = [64, 32], strides = [1, 1]} : vector<192x32xf32> to vector<64x32xf32>
    %48 = arith.mulf %47, %38 : vector<64x32xf32>
    %49 = tpu.concatenate %42, %44, %46, %48 in 1 : vector<64x32xf32>, vector<64x32xf32>, vector<64x32xf32>, vector<64x32xf32> -> vector<64x128xf32>
    %c0_15 = arith.constant 0 : index
    %c0_16 = arith.constant 0 : index
    %50 = vector.load %arg7[%c0_15, %c0_16] : memref<64x128xf32, #tpu.memory_space<vmem>>, vector<64x128xf32>
    tpu.vector_store %arg7[%c0_15, %c0_16], %49 {strides = array<i32>} : memref<64x128xf32, #tpu.memory_space<vmem>>, vector<64x128xf32>,
    return
  }
  func.func @transform_0(%arg0: i32) -> (i32, i32) {
    %c0_i32 = arith.constant 0 : i32
    %c0_i32_0 = arith.constant 0 : i32
    return %arg0, %c0_i32 : i32, i32
  }
  func.func @transform_1(%arg0: i32) -> (i32, i32, i32) {
    %c0_i32 = arith.constant 0 : i32
    %c0_i32_0 = arith.constant 0 : i32
    %c0_i32_1 = arith.constant 0 : i32
    return %c0_i32, %arg0, %c0_i32_0 : i32, i32, i32
  }
  func.func @transform_2(%arg0: i32) -> (i32, i32) {
    %c0_i32 = arith.constant 0 : i32
    %c0_i32_0 = arith.constant 0 : i32
    %c0_i32_1 = arith.constant 0 : i32
    return %c0_i32, %c0_i32_0 : i32, i32
  }
  func.func @transform_3(%arg0: i32) -> (i32, i32) {
    %c0_i32 = arith.constant 0 : i32
    %c0_i32_0 = arith.constant 0 : i32
    %c0_i32_1 = arith.constant 0 : i32
    return %c0_i32, %c0_i32_0 : i32, i32
  }
  func.func @transform_4(%arg0: i32) -> (i32, i32) {
    %c0_i32 = arith.constant 0 : i32
    %c0_i32_0 = arith.constant 0 : i32
    %c0_i32_1 = arith.constant 0 : i32
    return %c0_i32, %c0_i32_0 : i32, i32
  }
  func.func @transform_5(%arg0: i32) -> (i32, i32) {
    %c0_i32 = arith.constant 0 : i32
    %c0_i32_0 = arith.constant 0 : i32
    %c0_i32_1 = arith.constant 0 : i32
    return %c0_i32, %c0_i32_0 : i32, i32
  }
  func.func @transform_6(%arg0: i32) -> (i32, i32) {
    %c0_i32 = arith.constant 0 : i32
    %c0_i32_0 = arith.constant 0 : i32
    return %arg0, %c0_i32 : i32, i32
  }
}

</mosaic_0001>

<llo_original>
// kernel: update_painn.1
$region0: #{update_painn.1}
  #allocation0 [shape = 'u32[]', space=smem, size = 0x4, offset = 0x4, fixed_abs, tag = 'smem constant byte address 0x4 - core index']
  #allocation1 [shape = 'u32[144,128]{1,0:T(1,128)}', space=vmem, size = 0x12000, scoped, tag = 'internal scratch']
  %s0 = inlined_call_operand.vmem [shape: f32[512,32], index: 0, kind: input, shape index: {}]
  %s1 = inlined_call_operand.vmem [shape: f32[3,512,32], index: 1, kind: input, shape index: {}]
  %s2 = inlined_call_operand.vmem [shape: f32[32,64], index: 2, kind: input, shape index: {}]
  %s3 = inlined_call_operand.vmem [shape: f32[64,32], index: 3, kind: input, shape index: {}]
  %s4 = inlined_call_operand.vmem [shape: f32[32,96], index: 4, kind: input, shape index: {}]
  %s5 = inlined_call_operand.vmem [shape: f32[1,128], index: 5, kind: input, shape index: {}]
  %s6 = inlined_call_operand.hbm [shape: f32[512,128], index: 6, kind: output, shape index: {}]
  %s7 = sld [smem:[#allocation0]]
  $region95: #{update_painn.1} parent=0
    _
  %s9 = ssub.s32 1, %s7
  %s10 = scalar_select 0, %s9, %s7
  $region1: #{update_painn.1} parent=0
    #allocation2 [shape = 'u8[196608]{0}', space=vmem, size = 0x30000, scoped, tag = 'input window, operand 1']
    #allocation3 [shape = 'u8[65536]{0}', space=vmem, size = 0x10000, scoped, tag = 'output window, operand 0']
    #allocation4 [shape = 's32[2]{0}', space=sflag, size = 0x8, scoped, tag = 'scoped memory for update_painn.1']
    %11 = vsyncpa [#allocation4], 0
    %s12 = scalar_lea.sflag [#allocation4], 1
    %13 = vsyncpa %s12, 0
    loop: start=0, step=1, limit=10
    $region2: #{update_painn.1} parent=1 // loop_pre_header
      _
    $region3: #{update_painn.1} parent=1 // loop_header
      %s15 = sphi 0, %s19
      %p16 = scmp.ge.s32.totalorder %s15, 10
      %s25 = sphi 0, %s27
      %s28 = sphi 0, %s25
      %s29 = sphi 0, %s28
      %s45 = sphi 0, %s29
      %s51 = sphi 0, %s53
      %s54 = sphi 0, %s51
      %s55 = sphi 0, %s54
      %s71 = sphi 0, %s55
      %s75 = sphi 0, %s75
      %s77 = sphi 0, %s75
      %s78 = sphi 0, %s77
      %s92 = sphi 0, %s78
      %s96 = sphi 0, %s96
      %s98 = sphi 0, %s96
      %s99 = sphi 0, %s98
      %s113 = sphi 0, %s99
      %s117 = sphi 0, %s117
      %s119 = sphi 0, %s117
      %s120 = sphi 0, %s119
      %s134 = sphi 0, %s120
      %s138 = sphi 0, %s138
      %s140 = sphi 0, %s138
      %s141 = sphi 0, %s140
      %s155 = sphi 0, %s141
      %s161 = sphi 0, %s163
      %s164 = sphi 0, %s161
      %s165 = sphi 0, %s164
      %s181 = sphi 0, %s165
    $region4: #{update_painn.1} parent=1 // loop_header_branch
      %18 = sbr.rel (%p16) target = $region8
    $region5: #{update_painn.1} parent=1 // loop_body
      %s20 = ssub.s32 %s15, 1
      %s21 = ssub.s32 %s15, 2
      %s22 = sadd.s32 %s15, 1
      %s23 = ssub.s32 %s15, %s22
      %p24 = scmp.eq.s32.totalorder %s23, 0
      %s26 = sadd.s32 %s25, 1
      %s27 = scalar_select %p24, %s25, %s26
      %p30 = pneg %p24
      %p31 = scmp.eq.s32.totalorder %s15, 7
      %p32 = por %p30, %p31
      %p33 = scmp.ne.s32.totalorder %s25, %s28
      %p34 = scmp.eq.s32.totalorder %s15, 0
      %p35 = por %p33, %p34
      %p36 = scmp.ne.s32.totalorder %s25, %s28
      %p37 = scmp.eq.s32.totalorder %s20, 7
      %p38 = por %p36, %p37
      %p39 = scmp.ne.s32.totalorder %s28, %s29
      %p40 = scmp.eq.s32.totalorder %s20, 0
      %p41 = por %p39, %p40
      %p42 = scmp.ne.s32.totalorder %s28, %s29
      %p43 = scmp.eq.s32.totalorder %s21, 7
      %p44 = por %p42, %p43
      %p46 = scmp.ne.s32.totalorder %s29, %s45
      %p47 = scmp.eq.s32.totalorder %s21, 0
      %p48 = por %p46, %p47
      %s49 = ssub.s32 %s15, %s22
      %p50 = scmp.eq.s32.totalorder %s49, 0
      %s52 = sadd.s32 %s51, 1
      %s53 = scalar_select %p50, %s51, %s52
      %p56 = pneg %p50
      %p57 = scmp.eq.s32.totalorder %s15, 7
      %p58 = por %p56, %p57
      %p59 = scmp.ne.s32.totalorder %s51, %s54
      %p60 = scmp.eq.s32.totalorder %s15, 0
      %p61 = por %p59, %p60
      %p62 = scmp.ne.s32.totalorder %s51, %s54
      %p63 = scmp.eq.s32.totalorder %s20, 7
      %p64 = por %p62, %p63
      %p65 = scmp.ne.s32.totalorder %s54, %s55
      %p66 = scmp.eq.s32.totalorder %s20, 0
      %p67 = por %p65, %p66
      %p68 = scmp.ne.s32.totalorder %s54, %s55
      %p69 = scmp.eq.s32.totalorder %s21, 7
      %p70 = por %p68, %p69
      %p72 = scmp.ne.s32.totalorder %s55, %s71
      %p73 = scmp.eq.s32.totalorder %s21, 0
      %p74 = por %p72, %p73
      %s76 = sadd.s32 %s75, 1
      %p79 = scmp.eq.s32.totalorder %s15, 7
      %p80 = scmp.ne.s32.totalorder %s75, %s77
      %p81 = scmp.eq.s32.totalorder %s15, 0
      %p82 = por %p80, %p81
      %p83 = scmp.ne.s32.totalorder %s75, %s77
      %p84 = scmp.eq.s32.totalorder %s20, 7
      %p85 = por %p83, %p84
      %p86 = scmp.ne.s32.totalorder %s77, %s78
      %p87 = scmp.eq.s32.totalorder %s20, 0
      %p88 = por %p86, %p87
      %p89 = scmp.ne.s32.totalorder %s77, %s78
      %p90 = scmp.eq.s32.totalorder %s21, 7
      %p91 = por %p89, %p90
      %p93 = scmp.ne.s32.totalorder %s78, %s92
      %p94 = scmp.eq.s32.totalorder %s21, 0
      %p95 = por %p93, %p94
      %s97 = sadd.s32 %s96, 1
      %p100 = scmp.eq.s32.totalorder %s15, 7
      %p101 = scmp.ne.s32.totalorder %s96, %s98
      %p102 = scmp.eq.s32.totalorder %s15, 0
      %p103 = por %p101, %p102
      %p104 = scmp.ne.s32.totalorder %s96, %s98
      %p105 = scmp.eq.s32.totalorder %s20, 7
      %p106 = por %p104, %p105
      %p107 = scmp.ne.s32.totalorder %s98, %s99
      %p108 = scmp.eq.s32.totalorder %s20, 0
      %p109 = por %p107, %p108
      %p110 = scmp.ne.s32.totalorder %s98, %s99
      %p111 = scmp.eq.s32.totalorder %s21, 7
      %p112 = por %p110, %p111
      %p114 = scmp.ne.s32.totalorder %s99, %s113
      %p115 = scmp.eq.s32.totalorder %s21, 0
      %p116 = por %p114, %p115
      %s118 = sadd.s32 %s117, 1
      %p121 = scmp.eq.s32.totalorder %s15, 7
      %p122 = scmp.ne.s32.totalorder %s117, %s119
      %p123 = scmp.eq.s32.totalorder %s15, 0
      %p124 = por %p122, %p123
      %p125 = scmp.ne.s32.totalorder %s117, %s119
      %p126 = scmp.eq.s32.totalorder %s20, 7
      %p127 = por %p125, %p126
      %p128 = scmp.ne.s32.totalorder %s119, %s120
      %p129 = scmp.eq.s32.totalorder %s20, 0
      %p130 = por %p128, %p129
      %p131 = scmp.ne.s32.totalorder %s119, %s120
      %p132 = scmp.eq.s32.totalorder %s21, 7
      %p133 = por %p131, %p132
      %p135 = scmp.ne.s32.totalorder %s120, %s134
      %p136 = scmp.eq.s32.totalorder %s21, 0
      %p137 = por %p135, %p136
      %s139 = sadd.s32 %s138, 1
      %p142 = scmp.eq.s32.totalorder %s15, 7
      %p143 = scmp.ne.s32.totalorder %s138, %s140
      %p144 = scmp.eq.s32.totalorder %s15, 0
      %p145 = por %p143, %p144
      %p146 = scmp.ne.s32.totalorder %s138, %s140
      %p147 = scmp.eq.s32.totalorder %s20, 7
      %p148 = por %p146, %p147
      %p149 = scmp.ne.s32.totalorder %s140, %s141
      %p150 = scmp.eq.s32.totalorder %s20, 0
      %p151 = por %p149, %p150
      %p152 = scmp.ne.s32.totalorder %s140, %s141
      %p153 = scmp.eq.s32.totalorder %s21, 7
      %p154 = por %p152, %p153
      %p156 = scmp.ne.s32.totalorder %s141, %s155
      %p157 = scmp.eq.s32.totalorder %s21, 0
      %p158 = por %p156, %p157
      %s159 = ssub.s32 %s15, %s22
      %p160 = scmp.eq.s32.totalorder %s159, 0
      %s162 = sadd.s32 %s161, 1
      %s163 = scalar_select %p160, %s161, %s162
      %p166 = pneg %p160
      %p167 = scmp.eq.s32.totalorder %s15, 7
      %p168 = por %p166, %p167
      %p169 = scmp.ne.s32.totalorder %s161, %s164
      %p170 = scmp.eq.s32.totalorder %s15, 0
      %p171 = por %p169, %p170
      %p172 = scmp.ne.s32.totalorder %s161, %s164
      %p173 = scmp.eq.s32.totalorder %s20, 7
      %p174 = por %p172, %p173
      %p175 = scmp.ne.s32.totalorder %s164, %s165
      %p176 = scmp.eq.s32.totalorder %s20, 0
      %p177 = por %p175, %p176
      %p178 = scmp.ne.s32.totalorder %s164, %s165
      %p179 = scmp.eq.s32.totalorder %s21, 7
      %p180 = por %p178, %p179
      %p182 = scmp.ne.s32.totalorder %s165, %s181
      %p183 = scmp.eq.s32.totalorder %s21, 0
      %p184 = por %p182, %p183
      %p185 = scmp.le.s32.totalorder 1, %s15
      %p186 = scmp.lt.s32.totalorder %s15, 9
      %p187 = pnand %p185, %p186
      %p188 = pneg %p187
      // Predicated region
      $region9: #{update_painn.1} parent=5 // pred_check
        _
      $region10: #{update_painn.1} parent=5 // pred_check_branch
        %190 = sbr.rel (%p187) target = $region12
      $region11: #{update_painn.1} parent=5 // pred_region
        %s191 = ssub.s32 %s15, 1
        // Predicated region
        $region13: #{update_painn.1} parent=11 // pred_check
          %p192 = pneg %p88
        $region14: #{update_painn.1} parent=11 // pred_check_branch
          %194 = sbr.rel (%p192) target = $region16
        $region15: #{update_painn.1} parent=11 // pred_region
          _
        $region16: #{update_painn.1} parent=11 // pred_fallthru
          _
        // Predicated region
        $region17: #{update_painn.1} parent=11 // pred_check
          %p195 = pneg %p109
        $region18: #{update_painn.1} parent=11 // pred_check_branch
          %197 = sbr.rel (%p195) target = $region20
        $region19: #{update_painn.1} parent=11 // pred_region
          _
        $region20: #{update_painn.1} parent=11 // pred_fallthru
          _
        // Predicated region
        $region21: #{update_painn.1} parent=11 // pred_check
          %p198 = pneg %p130
        $region22: #{update_painn.1} parent=11 // pred_check_branch
          %200 = sbr.rel (%p198) target = $region24
        $region23: #{update_painn.1} parent=11 // pred_region
          _
        $region24: #{update_painn.1} parent=11 // pred_fallthru
          _
        // Predicated region
        $region25: #{update_painn.1} parent=11 // pred_check
          %p201 = pneg %p151
        $region26: #{update_painn.1} parent=11 // pred_check_branch
          %203 = sbr.rel (%p201) target = $region28
        $region27: #{update_painn.1} parent=11 // pred_region
          _
        $region28: #{update_painn.1} parent=11 // pred_fallthru
          _
      $region12: #{update_painn.1} parent=5 // pred_fallthru
        _
      %p204 = scmp.lt.s32.totalorder %s15, 8
      // Predicated region
      $region29: #{update_painn.1} parent=5 // pred_check
        %p205 = pneg %p204
      $region30: #{update_painn.1} parent=5 // pred_check_branch
        %207 = sbr.rel (%p205) target = $region32
      $region31: #{update_painn.1} parent=5 // pred_region
        // Predicated region
        $region33: #{update_painn.1} parent=31 // pred_check
          %p208 = pneg %p35
        $region34: #{update_painn.1} parent=31 // pred_check_branch
          %210 = sbr.rel (%p208) target = $region36
        $region35: #{update_painn.1} parent=31 // pred_region
          %s211 = smul.u32 8, %s15
          %p212 = scmp.lt.s32.totalorder %s211, 63
          %s213 = scalar_select %p212, %s211, 63
          %s214 = smul.addr %s213, 8
          %s215 = scalar_lea.vmem %s0, %s214
          %s216 = smul.u32 8, %s15
        $region36: #{update_painn.1} parent=31 // pred_fallthru
          _
        // Predicated region
        $region37: #{update_painn.1} parent=31 // pred_check
          %p217 = pneg %p61
        $region38: #{update_painn.1} parent=31 // pred_check_branch
          %219 = sbr.rel (%p217) target = $region40
        $region39: #{update_painn.1} parent=31 // pred_region
          %s220 = sand.u32 %s51, 1
          %s221 = sand.u32 %s51, 1
          %s222 = smul.addr %s221, 192
          %s223 = scalar_lea.vmem [#allocation2], %s222
          %s224 = smul.u32 8, %s15
          %s225 = smul.addr %s224, 8
          %s226 = scalar_lea.vmem %s1, %s225
          // Predicated region
          $region41: #{update_painn.1} parent=39 // pred_check
            _
          $region42: #{update_painn.1} parent=39 // pred_check_branch
            %228 = sbr.rel (0) target = $region44
          $region43: #{update_painn.1} parent=39 // pred_region
            // Predicated region
            $region45: #{update_painn.1} parent=43 // pred_check
              _
            $region46: #{update_painn.1} parent=43 // pred_check_branch
              %230 = sbr.rel (0) target = $region48
            $region47: #{update_painn.1} parent=43 // pred_region
              // Predicated region
              $region60: #{update_painn.1} parent=47 // pred_check
                _
              $region61: #{update_painn.1} parent=47 // pred_check_branch
                %292 = sbr.rel (0) target = $region63
              $region62: #{update_painn.1} parent=47 // pred_region
                loop: start=0, step=1, limit=1
                $region64: #{update_painn.1} parent=62 // loop_pre_header
                  _
                $region65: #{update_painn.1} parent=62 // loop_header
                  %s294 = sphi 0, %s298
                  %p295 = scmp.ge.s32.totalorder %s294, 1
                  %s299 = sphi %s226, %s226
                  %s300 = sphi %s223, %s223
                $region66: #{update_painn.1} parent=62 // loop_header_branch
                  %297 = sbr.rel (%p295) target = $region70
                $region67: #{update_painn.1} parent=62 // loop_body
                  %v301 = vld [vmem:[%s299] sm:$0xff]
                  %302 = vst [vmem:[%s300] sm:$0xff] %v301
                  %v303 = vld [vmem:[%s299 + $0x8] sm:$0xff]
                  %304 = vst [vmem:[%s300 + $0x8] sm:$0xff] %v303
                  %v305 = vld [vmem:[%s299 + $0x10] sm:$0xff]
                  %306 = vst [vmem:[%s300 + $0x10] sm:$0xff] %v305
                  %v307 = vld [vmem:[%s299 + $0x18] sm:$0xff]
                  %308 = vst [vmem:[%s300 + $0x18] sm:$0xff] %v307
                  %v309 = vld [vmem:[%s299 + $0x20] sm:$0xff]
                  %310 = vst [vmem:[%s300 + $0x20] sm:$0xff] %v309
                  %v311 = vld [vmem:[%s299 + $0x28] sm:$0xff]
                  %312 = vst [vmem:[%s300 + $0x28] sm:$0xff] %v311
                  %v313 = vld [vmem:[%s299 + $0x30] sm:$0xff]
                  %314 = vst [vmem:[%s300 + $0x30] sm:$0xff] %v313
                  %v315 = vld [vmem:[%s299 + $0x38] sm:$0xff]
                  %316 = vst [vmem:[%s300 + $0x38] sm:$0xff] %v315
                  %v317 = vld [vmem:[%s299 + $0x200] sm:$0xff]
                  %318 = vst [vmem:[%s300 + $0x40] sm:$0xff] %v317
                  %v319 = vld [vmem:[%s299 + $0x208] sm:$0xff]
                  %320 = vst [vmem:[%s300 + $0x48] sm:$0xff] %v319
                  %v321 = vld [vmem:[%s299 + $0x210] sm:$0xff]
                  %322 = vst [vmem:[%s300 + $0x50] sm:$0xff] %v321
                  %v323 = vld [vmem:[%s299 + $0x218] sm:$0xff]
                  %324 = vst [vmem:[%s300 + $0x58] sm:$0xff] %v323
                  %v325 = vld [vmem:[%s299 + $0x220] sm:$0xff]
                  %326 = vst [vmem:[%s300 + $0x60] sm:$0xff] %v325
                  %v327 = vld [vmem:[%s299 + $0x228] sm:$0xff]
                  %328 = vst [vmem:[%s300 + $0x68] sm:$0xff] %v327
                  %v329 = vld [vmem:[%s299 + $0x230] sm:$0xff]
                  %330 = vst [vmem:[%s300 + $0x70] sm:$0xff] %v329
                  %v331 = vld [vmem:[%s299 + $0x238] sm:$0xff]
                  %332 = vst [vmem:[%s300 + $0x78] sm:$0xff] %v331
                  %v333 = vld [vmem:[%s299 + $0x400] sm:$0xff]
                  %334 = vst [vmem:[%s300 + $0x80] sm:$0xff] %v333
                  %v335 = vld [vmem:[%s299 + $0x408] sm:$0xff]
                  %336 = vst [vmem:[%s300 + $0x88] sm:$0xff] %v335
                  %v337 = vld [vmem:[%s299 + $0x410] sm:$0xff]
                  %338 = vst [vmem:[%s300 + $0x90] sm:$0xff] %v337
                  %v339 = vld [vmem:[%s299 + $0x418] sm:$0xff]
                  %340 = vst [vmem:[%s300 + $0x98] sm:$0xff] %v339
                  %v341 = vld [vmem:[%s299 + $0x420] sm:$0xff]
                  %342 = vst [vmem:[%s300 + $0xa0] sm:$0xff] %v341
                  %v343 = vld [vmem:[%s299 + $0x428] sm:$0xff]
                  %344 = vst [vmem:[%s300 + $0xa8] sm:$0xff] %v343
                  %v345 = vld [vmem:[%s299 + $0x430] sm:$0xff]
                  %346 = vst [vmem:[%s300 + $0xb0] sm:$0xff] %v345
                  %v347 = vld [vmem:[%s299 + $0x438] sm:$0xff]
                  %348 = vst [vmem:[%s300 + $0xb8] sm:$0xff] %v347
                $region68: #{update_painn.1} parent=62 // loop_footer
                  %s298 = sadd.s32 1, %s294
                $region69: #{update_painn.1} parent=62 // loop_footer_branch
                  %293 = sbr.rel target = $region65
                $region70: #{update_painn.1} parent=62 // loop_exit
                  _
              $region63: #{update_painn.1} parent=47 // pred_fallthru
                _
              // Predicated region
              $region71: #{update_painn.1} parent=47 // pred_check
                _
              $region72: #{update_painn.1} parent=47 // pred_check_branch
                %350 = sbr.rel target = $region74
              $region73: #{update_painn.1} parent=47 // pred_region
                _
              $region74: #{update_painn.1} parent=47 // pred_fallthru
                _
            $region48: #{update_painn.1} parent=43 // pred_fallthru
              _
            // Predicated region
            $region49: #{update_painn.1} parent=43 // pred_check
              _
            $region50: #{update_painn.1} parent=43 // pred_check_branch
              %232 = sbr.rel target = $region52
            $region51: #{update_painn.1} parent=43 // pred_region
              %s234 = ssub.s32 256, 1
              loop: start=0, step=1, limit=1
              $region53: #{update_painn.1} parent=51 // loop_pre_header
                _
              $region54: #{update_painn.1} parent=51 // loop_header
                %s236 = sphi 0, %s240
                %p237 = scmp.ge.s32.totalorder %s236, 1
                %s241 = sphi %s226, %s226
                %s242 = sphi %s223, %s223
              $region55: #{update_painn.1} parent=51 // loop_header_branch
                %239 = sbr.rel (%p237) target = $region59
              $region56: #{update_painn.1} parent=51 // loop_body
                %v243 = vld [vmem:[%s241] sm:%s234]
                %244 = vst [vmem:[%s242] sm:%s234] %v243
                %v245 = vld [vmem:[%s241 + $0x8] sm:%s234]
                %246 = vst [vmem:[%s242 + $0x8] sm:%s234] %v245
                %v247 = vld [vmem:[%s241 + $0x10] sm:%s234]
                %248 = vst [vmem:[%s242 + $0x10] sm:%s234] %v247
                %v249 = vld [vmem:[%s241 + $0x18] sm:%s234]
                %250 = vst [vmem:[%s242 + $0x18] sm:%s234] %v249
                %v251 = vld [vmem:[%s241 + $0x20] sm:%s234]
                %252 = vst [vmem:[%s242 + $0x20] sm:%s234] %v251
                %v253 = vld [vmem:[%s241 + $0x28] sm:%s234]
                %254 = vst [vmem:[%s242 + $0x28] sm:%s234] %v253
                %v255 = vld [vmem:[%s241 + $0x30] sm:%s234]
                %256 = vst [vmem:[%s242 + $0x30] sm:%s234] %v255
                %v257 = vld [vmem:[%s241 + $0x38] sm:%s234]
                %258 = vst [vmem:[%s242 + $0x38] sm:%s234] %v257
                %v259 = vld [vmem:[%s241 + $0x200] sm:%s234]
                %260 = vst [vmem:[%s242 + $0x40] sm:%s234] %v259
                %v261 = vld [vmem:[%s241 + $0x208] sm:%s234]
                %262 = vst [vmem:[%s242 + $0x48] sm:%s234] %v261
                %v263 = vld [vmem:[%s241 + $0x210] sm:%s234]
                %264 = vst [vmem:[%s242 + $0x50] sm:%s234] %v263
                %v265 = vld [vmem:[%s241 + $0x218] sm:%s234]
                %266 = vst [vmem:[%s242 + $0x58] sm:%s234] %v265
                %v267 = vld [vmem:[%s241 + $0x220] sm:%s234]
                %268 = vst [vmem:[%s242 + $0x60] sm:%s234] %v267
                %v269 = vld [vmem:[%s241 + $0x228] sm:%s234]
                %270 = vst [vmem:[%s242 + $0x68] sm:%s234] %v269
                %v271 = vld [vmem:[%s241 + $0x230] sm:%s234]
                %272 = vst [vmem:[%s242 + $0x70] sm:%s234] %v271
                %v273 = vld [vmem:[%s241 + $0x238] sm:%s234]
                %274 = vst [vmem:[%s242 + $0x78] sm:%s234] %v273
                %v275 = vld [vmem:[%s241 + $0x400] sm:%s234]
                %276 = vst [vmem:[%s242 + $0x80] sm:%s234] %v275
                %v277 = vld [vmem:[%s241 + $0x408] sm:%s234]
                %278 = vst [vmem:[%s242 + $0x88] sm:%s234] %v277
                %v279 = vld [vmem:[%s241 + $0x410] sm:%s234]
                %280 = vst [vmem:[%s242 + $0x90] sm:%s234] %v279
                %v281 = vld [vmem:[%s241 + $0x418] sm:%s234]
                %282 = vst [vmem:[%s242 + $0x98] sm:%s234] %v281
                %v283 = vld [vmem:[%s241 + $0x420] sm:%s234]
                %284 = vst [vmem:[%s242 + $0xa0] sm:%s234] %v283
                %v285 = vld [vmem:[%s241 + $0x428] sm:%s234]
                %286 = vst [vmem:[%s242 + $0xa8] sm:%s234] %v285
                %v287 = vld [vmem:[%s241 + $0x430] sm:%s234]
                %288 = vst [vmem:[%s242 + $0xb0] sm:%s234] %v287
                %v289 = vld [vmem:[%s241 + $0x438] sm:%s234]
                %290 = vst [vmem:[%s242 + $0xb8] sm:%s234] %v289
              $region57: #{update_painn.1} parent=51 // loop_footer
                %s240 = sadd.s32 1, %s236
              $region58: #{update_painn.1} parent=51 // loop_footer_branch
                %235 = sbr.rel target = $region54
              $region59: #{update_painn.1} parent=51 // loop_exit
                _
            $region52: #{update_painn.1} parent=43 // pred_fallthru
              _
          $region44: #{update_painn.1} parent=39 // pred_fallthru
            _
          %351 = vnop
        $region40: #{update_painn.1} parent=31 // pred_fallthru
          _
      $region32: #{update_painn.1} parent=5 // pred_fallthru
        _
      %p352 = scmp.le.s32.totalorder 1, %s15
      %p353 = scmp.lt.s32.totalorder %s15, 9
      %p354 = pnand %p352, %p353
      %p355 = pneg %p354
      // Predicated region
      $region75: #{update_painn.1} parent=5 // pred_check
        _
      $region76: #{update_painn.1} parent=5 // pred_check_branch
        %357 = sbr.rel (%p354) target = $region78
      $region77: #{update_painn.1} parent=5 // pred_region
        %s358 = ssub.s32 %s15, 1
        %s359 = sand.u32 %s54, 1
        %s360 = sand.u32 %s54, 1
        %s361 = smul.addr %s360, 192
        %s362 = scalar_lea.vmem [#allocation2], %s361
        // Predicated region
        $region79: #{update_painn.1} parent=77 // pred_check
          %p363 = pneg %p67
        $region80: #{update_painn.1} parent=77 // pred_check_branch
          %365 = sbr.rel (%p363) target = $region82
        $region81: #{update_painn.1} parent=77 // pred_region
          _
        $region82: #{update_painn.1} parent=77 // pred_fallthru
          _
        %s366 = smul.u32 8, %s20
        %p367 = scmp.lt.s32.totalorder %s366, 63
        %s368 = scalar_select %p367, %s366, 63
        %s369 = smul.addr %s368, 8
        %s370 = scalar_lea.vmem %s0, %s369
        %p371 = pneg %p41
        %p372 = pneg %p38
        %s373 = sand.u32 %s54, 1
        %s374 = sand.u32 %s54, 1
        %s375 = smul.addr %s374, 192
        %s376 = scalar_lea.vmem [#allocation2], %s375
        %p377 = pneg %p67
        %p378 = pneg %p64
        %p379 = pneg %p88
        %p380 = pneg %p85
        %p381 = pneg %p109
        %p382 = pneg %p106
        %p383 = pneg %p130
        %p384 = pneg %p127
        %p385 = pneg %p151
        %p386 = pneg %p148
        %p387 = pneg %p177
        %p388 = pneg %p174
        %s389 = sand.u32 %s164, 1
        %s390 = scalar_lea.sflag [#allocation4], %s389
        %s391 = sand.u32 %s164, 1
        %s392 = smul.addr %s391, 64
        %s393 = scalar_lea.vmem [#allocation3], %s392
        %s394 = smul.u32 8, %s20
        %p395 = scmp.lt.s32.totalorder %s394, 63
        %s396 = scalar_select %p395, %s394, 63
        %s397 = smul.addr %s396, 8
        %s398 = scalar_lea.vmem %s0, %s397
        %s399 = smul.u32 8, %s20
        %s400 = smul.u32 8, %s20
        %s401 = smul.u32 8, %s20
        %v402 = vld [vmem:[%s362] sm:$0xff]
        %v403 = vld [vmem:[%s362 + $0x8] sm:$0xff]
        %v404 = vld [vmem:[%s362 + $0x10] sm:$0xff]
        %v405 = vld [vmem:[%s362 + $0x18] sm:$0xff]
        %v406 = vld [vmem:[%s362 + $0x20] sm:$0xff]
        %v407 = vld [vmem:[%s362 + $0x28] sm:$0xff]
        %v408 = vld [vmem:[%s362 + $0x30] sm:$0xff]
        %v409 = vld [vmem:[%s362 + $0x38] sm:$0xff]
        %v410 = vld [vmem:[%s362 + $0x40] sm:$0xff]
        %v411 = vld [vmem:[%s362 + $0x48] sm:$0xff]
        %v412 = vld [vmem:[%s362 + $0x50] sm:$0xff]
        %v413 = vld [vmem:[%s362 + $0x58] sm:$0xff]
        %v414 = vld [vmem:[%s362 + $0x60] sm:$0xff]
        %v415 = vld [vmem:[%s362 + $0x68] sm:$0xff]
        %v416 = vld [vmem:[%s362 + $0x70] sm:$0xff]
        %v417 = vld [vmem:[%s362 + $0x78] sm:$0xff]
        %v418 = vld [vmem:[%s362 + $0x80] sm:$0xff]
        %v419 = vld [vmem:[%s362 + $0x88] sm:$0xff]
        %v420 = vld [vmem:[%s362 + $0x90] sm:$0xff]
        %v421 = vld [vmem:[%s362 + $0x98] sm:$0xff]
        %v422 = vld [vmem:[%s362 + $0xa0] sm:$0xff]
        %v423 = vld [vmem:[%s362 + $0xa8] sm:$0xff]
        %v424 = vld [vmem:[%s362 + $0xb0] sm:$0xff]
        %v425 = vld [vmem:[%s362 + $0xb8] sm:$0xff]
        %v426 = vld [vmem:[%s2] sm:$0xff]
        %v427 = vld [vmem:[%s2 + $0x8] sm:$0xff]
        %v428 = vld [vmem:[%s2 + $0x10] sm:$0xff]
        %v429 = vld [vmem:[%s2 + $0x18] sm:$0xff]
        %vm430 = vcmask 261120
        %v432 = vsel %vm430, %v402, 0
        %v435 = vsel %vm430, %v403, 0
        %v438 = vsel %vm430, %v404, 0
        %v441 = vsel %vm430, %v405, 0
        %v444 = vsel %vm430, %v406, 0
        %v447 = vsel %vm430, %v407, 0
        %v450 = vsel %vm430, %v408, 0
        %v453 = vsel %vm430, %v409, 0
        %v456 = vsel %vm430, %v410, 0
        %v459 = vsel %vm430, %v411, 0
        %v462 = vsel %vm430, %v412, 0
        %v465 = vsel %vm430, %v413, 0
        %v468 = vsel %vm430, %v414, 0
        %v471 = vsel %vm430, %v415, 0
        %v474 = vsel %vm430, %v416, 0
        %v477 = vsel %vm430, %v417, 0
        %v480 = vsel %vm430, %v418, 0
        %v483 = vsel %vm430, %v419, 0
        %v486 = vsel %vm430, %v420, 0
        %v489 = vsel %vm430, %v421, 0
        %v492 = vsel %vm430, %v422, 0
        %v495 = vsel %vm430, %v423, 0
        %v498 = vsel %vm430, %v424, 0
        %v501 = vsel %vm430, %v425, 0
        %503 = vmatprep.subr.mxu0 0.0
        %504 = vmatpush1.msra.mxu0 0.0
        %505 = vmatprep.subr.mxu0 0.0
        %506 = vmatpush1.msra.mxu0 0.0
        %507 = vmatprep.subr.mxu0 0.0
        %508 = vmatpush1.msra.mxu0 0.0
        %509 = vmatprep.subr.mxu0 0.0
        %510 = vmatpush1.msra.mxu0 0.0
        %511 = vmatprep.subr.mxu0 0.0
        %512 = vmatpush1.msra.mxu0 0.0
        %513 = vmatprep.subr.mxu0 0.0
        %514 = vmatpush1.msra.mxu0 0.0
        %515 = vmatprep.subr.mxu0 0.0
        %516 = vmatpush1.msra.mxu0 0.0
        %517 = vmatprep.subr.mxu0 0.0
        %518 = vmatpush1.msra.mxu0 0.0
        %519 = vmatprep.subr.mxu0 0.0
        %520 = vmatpush1.msra.mxu0 0.0
        %521 = vmatprep.subr.mxu0 0.0
        %522 = vmatpush1.msra.mxu0 0.0
        %523 = vmatprep.subr.mxu0 0.0
        %524 = vmatpush1.msra.mxu0 0.0
        %525 = vmatprep.subr.mxu0 0.0
        %526 = vmatpush1.msra.mxu0 0.0
        %527 = vmatprep.subr.mxu0 0.0
        %528 = vmatpush1.msra.mxu0 %v429
        %529 = vmatprep.subr.mxu0 0.0
        %530 = vmatpush1.msra.mxu0 %v428
        %531 = vmatprep.subr.mxu0 0.0
        %532 = vmatpush1.msra.mxu0 %v427
        %533 = vmatprep.subr.mxu0 0.0
        %534 = vmatpush1.msra.mxu0 %v426
        %535 = vmatprep.subr.mxu0 0.0
        %536 = vmatpush2.msra.mxu0 0.0
        %537 = vmatprep.subr.mxu0 0.0
        %538 = vmatpush2.msra.mxu0 0.0
        %539 = vmatprep.subr.mxu0 0.0
        %540 = vmatpush2.msra.mxu0 0.0
        %541 = vmatprep.subr.mxu0 0.0
        %542 = vmatpush2.msra.mxu0 0.0
        %543 = vmatprep.subr.mxu0 0.0
        %544 = vmatpush2.msra.mxu0 0.0
        %545 = vmatprep.subr.mxu0 0.0
        %546 = vmatpush2.msra.mxu0 0.0
        %547 = vmatprep.subr.mxu0 0.0
        %548 = vmatpush2.msra.mxu0 0.0
        %549 = vmatprep.subr.mxu0 0.0
        %550 = vmatpush2.msra.mxu0 0.0
        %551 = vmatprep.subr.mxu0 0.0
        %552 = vmatpush2.msra.mxu0 0.0
        %553 = vmatprep.subr.mxu0 0.0
        %554 = vmatpush2.msra.mxu0 0.0
        %555 = vmatprep.subr.mxu0 0.0
        %556 = vmatpush2.msra.mxu0 0.0
        %557 = vmatprep.subr.mxu0 0.0
        %558 = vmatpush2.msra.mxu0 0.0
        %559 = vmatprep.subr.mxu0 0.0
        %560 = vmatpush2.msra.mxu0 0.0
        %561 = vmatprep.subr.mxu0 0.0
        %562 = vmatpush2.msra.mxu0 0.0
        %563 = vmatprep.subr.mxu0 0.0
        %564 = vmatpush2.msra.mxu0 0.0
        %565 = vmatprep.subr.mxu0 0.0
        %566 = vmatpush2.msra.mxu0 0.0
        %567 = vmatprep.mubr.f32.mxu0 0.0
        %568 = vmatmul.mubr.f32.gmra.mxu0 %v432
        %v569 = vpop.f32.mrf.mxu0
        %v570 = vadd.f32 0.0, %v569
        %v571 = vpop.f32.mrf.mxu0
        %572 = vmatprep.mubr.f32.mxu0 0.0
        %573 = vmatmul.mubr.f32.gmra.mxu0 %v435
        %v574 = vpop.f32.mrf.mxu0
        %v575 = vadd.f32 0.0, %v574
        %v576 = vpop.f32.mrf.mxu0
        %577 = vmatprep.mubr.f32.mxu0 0.0
        %578 = vmatmul.mubr.f32.gmra.mxu0 %v438
        %v579 = vpop.f32.mrf.mxu0
        %v580 = vadd.f32 0.0, %v579
        %v581 = vpop.f32.mrf.mxu0
        %582 = vmatprep.mubr.f32.mxu0 0.0
        %583 = vmatmul.mubr.f32.gmra.mxu0 %v441
        %v584 = vpop.f32.mrf.mxu0
        %v585 = vadd.f32 0.0, %v584
        %v586 = vpop.f32.mrf.mxu0
        %587 = vmatprep.mubr.f32.mxu0 0.0
        %588 = vmatmul.mubr.f32.gmra.mxu0 %v444
        %v589 = vpop.f32.mrf.mxu0
        %v590 = vadd.f32 0.0, %v589
        %v591 = vpop.f32.mrf.mxu0
        %592 = vmatprep.mubr.f32.mxu0 0.0
        %593 = vmatmul.mubr.f32.gmra.mxu0 %v447
        %v594 = vpop.f32.mrf.mxu0
        %v595 = vadd.f32 0.0, %v594
        %v596 = vpop.f32.mrf.mxu0
        %597 = vmatprep.mubr.f32.mxu0 0.0
        %598 = vmatmul.mubr.f32.gmra.mxu0 %v450
        %v599 = vpop.f32.mrf.mxu0
        %v600 = vadd.f32 0.0, %v599
        %v601 = vpop.f32.mrf.mxu0
        %602 = vmatprep.mubr.f32.mxu0 0.0
        %603 = vmatmul.mubr.f32.gmra.mxu0 %v453
        %v604 = vpop.f32.mrf.mxu0
        %v605 = vadd.f32 0.0, %v604
        %v606 = vpop.f32.mrf.mxu0
        %607 = vmatprep.mubr.f32.mxu0 0.0
        %608 = vmatmul.mubr.f32.gmra.mxu0 %v456
        %v609 = vpop.f32.mrf.mxu0
        %v610 = vadd.f32 0.0, %v609
        %v611 = vpop.f32.mrf.mxu0
        %612 = vmatprep.mubr.f32.mxu0 0.0
        %613 = vmatmul.mubr.f32.gmra.mxu0 %v459
        %v614 = vpop.f32.mrf.mxu0
        %v615 = vadd.f32 0.0, %v614
        %v616 = vpop.f32.mrf.mxu0
        %617 = vmatprep.mubr.f32.mxu0 0.0
        %618 = vmatmul.mubr.f32.gmra.mxu0 %v462
        %v619 = vpop.f32.mrf.mxu0
        %v620 = vadd.f32 0.0, %v619
        %v621 = vpop.f32.mrf.mxu0
        %622 = vmatprep.mubr.f32.mxu0 0.0
        %623 = vmatmul.mubr.f32.gmra.mxu0 %v465
        %v624 = vpop.f32.mrf.mxu0
        %v625 = vadd.f32 0.0, %v624
        %v626 = vpop.f32.mrf.mxu0
        %627 = vmatprep.mubr.f32.mxu0 0.0
        %628 = vmatmul.mubr.f32.gmra.mxu0 %v468
        %v629 = vpop.f32.mrf.mxu0
        %v630 = vadd.f32 0.0, %v629
        %v631 = vpop.f32.mrf.mxu0
        %632 = vmatprep.mubr.f32.mxu0 0.0
        %633 = vmatmul.mubr.f32.gmra.mxu0 %v471
        %v634 = vpop.f32.mrf.mxu0
        %v635 = vadd.f32 0.0, %v634
        %v636 = vpop.f32.mrf.mxu0
        %637 = vmatprep.mubr.f32.mxu0 0.0
        %638 = vmatmul.mubr.f32.gmra.mxu0 %v474
        %v639 = vpop.f32.mrf.mxu0
        %v640 = vadd.f32 0.0, %v639
        %v641 = vpop.f32.mrf.mxu0
        %642 = vmatprep.mubr.f32.mxu0 0.0
        %643 = vmatmul.mubr.f32.gmra.mxu0 %v477
        %v644 = vpop.f32.mrf.mxu0
        %v645 = vadd.f32 0.0, %v644
        %v646 = vpop.f32.mrf.mxu0
        %647 = vmatprep.mubr.f32.mxu0 0.0
        %648 = vmatmul.mubr.f32.gmra.mxu0 %v480
        %v649 = vpop.f32.mrf.mxu0
        %v650 = vadd.f32 0.0, %v649
        %v651 = vpop.f32.mrf.mxu0
        %652 = vmatprep.mubr.f32.mxu0 0.0
        %653 = vmatmul.mubr.f32.gmra.mxu0 %v483
        %v654 = vpop.f32.mrf.mxu0
        %v655 = vadd.f32 0.0, %v654
        %v656 = vpop.f32.mrf.mxu0
        %657 = vmatprep.mubr.f32.mxu0 0.0
        %658 = vmatmul.mubr.f32.gmra.mxu0 %v486
        %v659 = vpop.f32.mrf.mxu0
        %v660 = vadd.f32 0.0, %v659
        %v661 = vpop.f32.mrf.mxu0
        %662 = vmatprep.mubr.f32.mxu0 0.0
        %663 = vmatmul.mubr.f32.gmra.mxu0 %v489
        %v664 = vpop.f32.mrf.mxu0
        %v665 = vadd.f32 0.0, %v664
        %v666 = vpop.f32.mrf.mxu0
        %667 = vmatprep.mubr.f32.mxu0 0.0
        %668 = vmatmul.mubr.f32.gmra.mxu0 %v492
        %v669 = vpop.f32.mrf.mxu0
        %v670 = vadd.f32 0.0, %v669
        %v671 = vpop.f32.mrf.mxu0
        %672 = vmatprep.mubr.f32.mxu0 0.0
        %673 = vmatmul.mubr.f32.gmra.mxu0 %v495
        %v674 = vpop.f32.mrf.mxu0
        %v675 = vadd.f32 0.0, %v674
        %v676 = vpop.f32.mrf.mxu0
        %677 = vmatprep.mubr.f32.mxu0 0.0
        %678 = vmatmul.mubr.f32.gmra.mxu0 %v498
        %v679 = vpop.f32.mrf.mxu0
        %v680 = vadd.f32 0.0, %v679
        %v681 = vpop.f32.mrf.mxu0
        %682 = vmatprep.mubr.f32.mxu0 0.0
        %683 = vmatmul.mubr.f32.gmra.mxu0 %v501
        %v684 = vpop.f32.mrf.mxu0
        %v685 = vadd.f32 0.0, %v684
        %v686 = vpop.f32.mrf.mxu0
        %687 = vdwg.mxu0
        %712 = vrot.lane.b32.xlu0 %v570, 96
        %v713 = vpop.permute.xlu0 %712
        %714 = vrot.lane.b32.xlu0 %v575, 96
        %v715 = vpop.permute.xlu0 %714
        %716 = vrot.lane.b32.xlu0 %v580, 96
        %v717 = vpop.permute.xlu0 %716
        %718 = vrot.lane.b32.xlu0 %v585, 96
        %v719 = vpop.permute.xlu0 %718
        %720 = vrot.lane.b32.xlu0 %v590, 96
        %v721 = vpop.permute.xlu0 %720
        %722 = vrot.lane.b32.xlu0 %v595, 96
        %v723 = vpop.permute.xlu0 %722
        %724 = vrot.lane.b32.xlu0 %v600, 96
        %v725 = vpop.permute.xlu0 %724
        %726 = vrot.lane.b32.xlu0 %v605, 96
        %v727 = vpop.permute.xlu0 %726
        %728 = vrot.lane.b32.xlu0 %v610, 96
        %v729 = vpop.permute.xlu0 %728
        %730 = vrot.lane.b32.xlu0 %v615, 96
        %v731 = vpop.permute.xlu0 %730
        %732 = vrot.lane.b32.xlu0 %v620, 96
        %v733 = vpop.permute.xlu0 %732
        %734 = vrot.lane.b32.xlu0 %v625, 96
        %v735 = vpop.permute.xlu0 %734
        %736 = vrot.lane.b32.xlu0 %v630, 96
        %v737 = vpop.permute.xlu0 %736
        %738 = vrot.lane.b32.xlu0 %v635, 96
        %v739 = vpop.permute.xlu0 %738
        %740 = vrot.lane.b32.xlu0 %v640, 96
        %v741 = vpop.permute.xlu0 %740
        %742 = vrot.lane.b32.xlu0 %v645, 96
        %v743 = vpop.permute.xlu0 %742
        %744 = vrot.lane.b32.xlu0 %v650, 96
        %v745 = vpop.permute.xlu0 %744
        %746 = vrot.lane.b32.xlu0 %v655, 96
        %v747 = vpop.permute.xlu0 %746
        %748 = vrot.lane.b32.xlu0 %v660, 96
        %v749 = vpop.permute.xlu0 %748
        %750 = vrot.lane.b32.xlu0 %v665, 96
        %v751 = vpop.permute.xlu0 %750
        %752 = vrot.lane.b32.xlu0 %v670, 96
        %v753 = vpop.permute.xlu0 %752
        %754 = vrot.lane.b32.xlu0 %v675, 96
        %v755 = vpop.permute.xlu0 %754
        %756 = vrot.lane.b32.xlu0 %v680, 96
        %v757 = vpop.permute.xlu0 %756
        %758 = vrot.lane.b32.xlu0 %v685, 96
        %v759 = vpop.permute.xlu0 %758
        %v784 = vmul.f32 %v570, %v713
        %v785 = vmul.f32 %v575, %v715
        %v786 = vmul.f32 %v580, %v717
        %v787 = vmul.f32 %v585, %v719
        %v788 = vmul.f32 %v590, %v721
        %v789 = vmul.f32 %v595, %v723
        %v790 = vmul.f32 %v600, %v725
        %v791 = vmul.f32 %v605, %v727
        %v792 = vmul.f32 %v610, %v729
        %v793 = vmul.f32 %v615, %v731
        %v794 = vmul.f32 %v620, %v733
        %v795 = vmul.f32 %v625, %v735
        %v796 = vmul.f32 %v630, %v737
        %v797 = vmul.f32 %v635, %v739
        %v798 = vmul.f32 %v640, %v741
        %v799 = vmul.f32 %v645, %v743
        %v800 = vmul.f32 %v650, %v745
        %v801 = vmul.f32 %v655, %v747
        %v802 = vmul.f32 %v660, %v749
        %v803 = vmul.f32 %v665, %v751
        %v804 = vmul.f32 %v670, %v753
        %v805 = vmul.f32 %v675, %v755
        %v806 = vmul.f32 %v680, %v757
        %v807 = vmul.f32 %v685, %v759
        %v808 = vadd.f32 %v784, %v792
        %v809 = vadd.f32 %v785, %v793
        %v810 = vadd.f32 %v786, %v794
        %v811 = vadd.f32 %v787, %v795
        %v812 = vadd.f32 %v788, %v796
        %v813 = vadd.f32 %v789, %v797
        %v814 = vadd.f32 %v790, %v798
        %v815 = vadd.f32 %v791, %v799
        %v816 = vadd.f32 %v808, %v800
        %v817 = vadd.f32 %v809, %v801
        %v818 = vadd.f32 %v810, %v802
        %v819 = vadd.f32 %v811, %v803
        %v820 = vadd.f32 %v812, %v804
        %v821 = vadd.f32 %v813, %v805
        %v822 = vadd.f32 %v814, %v806
        %v823 = vadd.f32 %v815, %v807
        %v824 = vmul.f32 %v570, %v570
        %v825 = vmul.f32 %v575, %v575
        %v826 = vmul.f32 %v580, %v580
        %v827 = vmul.f32 %v585, %v585
        %v828 = vmul.f32 %v590, %v590
        %v829 = vmul.f32 %v595, %v595
        %v830 = vmul.f32 %v600, %v600
        %v831 = vmul.f32 %v605, %v605
        %v832 = vmul.f32 %v610, %v610
        %v833 = vmul.f32 %v615, %v615
        %v834 = vmul.f32 %v620, %v620
        %v835 = vmul.f32 %v625, %v625
        %v836 = vmul.f32 %v630, %v630
        %v837 = vmul.f32 %v635, %v635
        %v838 = vmul.f32 %v640, %v640
        %v839 = vmul.f32 %v645, %v645
        %v840 = vmul.f32 %v650, %v650
        %v841 = vmul.f32 %v655, %v655
        %v842 = vmul.f32 %v660, %v660
        %v843 = vmul.f32 %v665, %v665
        %v844 = vmul.f32 %v670, %v670
        %v845 = vmul.f32 %v675, %v675
        %v846 = vmul.f32 %v680, %v680
        %v847 = vmul.f32 %v685, %v685
        %v848 = vadd.f32 %v824, %v832
        %v849 = vadd.f32 %v825, %v833
        %v850 = vadd.f32 %v826, %v834
        %v851 = vadd.f32 %v827, %v835
        %v852 = vadd.f32 %v828, %v836
        %v853 = vadd.f32 %v829, %v837
        %v854 = vadd.f32 %v830, %v838
        %v855 = vadd.f32 %v831, %v839
        %v856 = vadd.f32 %v848, %v840
        %v857 = vadd.f32 %v849, %v841
        %v858 = vadd.f32 %v850, %v842
        %v859 = vadd.f32 %v851, %v843
        %v860 = vadd.f32 %v852, %v844
        %v861 = vadd.f32 %v853, %v845
        %v862 = vadd.f32 %v854, %v846
        %v863 = vadd.f32 %v855, %v847
        %v864 = vrsqrt.pop %v856
        %v865 = vmul.f32 %v856, %v864
        %vm866 = vcmp.eq.f32.partialorder %v856, inf
        %v867 = vsel %vm866, %v856, %v865
        %vm868 = vcmp.eq.f32.partialorder %v856, 0.0
        %v869 = vand.u32 %v856, 2147483648
        %v870 = vsel %vm868, %v869, %v867
        %v871 = vrsqrt.pop %v857
        %v872 = vmul.f32 %v857, %v871
        %vm873 = vcmp.eq.f32.partialorder %v857, inf
        %v874 = vsel %vm873, %v857, %v872
        %vm875 = vcmp.eq.f32.partialorder %v857, 0.0
        %v876 = vand.u32 %v857, 2147483648
        %v877 = vsel %vm875, %v876, %v874
        %v878 = vrsqrt.pop %v858
        %v879 = vmul.f32 %v858, %v878
        %vm880 = vcmp.eq.f32.partialorder %v858, inf
        %v881 = vsel %vm880, %v858, %v879
        %vm882 = vcmp.eq.f32.partialorder %v858, 0.0
        %v883 = vand.u32 %v858, 2147483648
        %v884 = vsel %vm882, %v883, %v881
        %v885 = vrsqrt.pop %v859
        %v886 = vmul.f32 %v859, %v885
        %vm887 = vcmp.eq.f32.partialorder %v859, inf
        %v888 = vsel %vm887, %v859, %v886
        %vm889 = vcmp.eq.f32.partialorder %v859, 0.0
        %v890 = vand.u32 %v859, 2147483648
        %v891 = vsel %vm889, %v890, %v888
        %v892 = vrsqrt.pop %v860
        %v893 = vmul.f32 %v860, %v892
        %vm894 = vcmp.eq.f32.partialorder %v860, inf
        %v895 = vsel %vm894, %v860, %v893
        %vm896 = vcmp.eq.f32.partialorder %v860, 0.0
        %v897 = vand.u32 %v860, 2147483648
        %v898 = vsel %vm896, %v897, %v895
        %v899 = vrsqrt.pop %v861
        %v900 = vmul.f32 %v861, %v899
        %vm901 = vcmp.eq.f32.partialorder %v861, inf
        %v902 = vsel %vm901, %v861, %v900
        %vm903 = vcmp.eq.f32.partialorder %v861, 0.0
        %v904 = vand.u32 %v861, 2147483648
        %v905 = vsel %vm903, %v904, %v902
        %v906 = vrsqrt.pop %v862
        %v907 = vmul.f32 %v862, %v906
        %vm908 = vcmp.eq.f32.partialorder %v862, inf
        %v909 = vsel %vm908, %v862, %v907
        %vm910 = vcmp.eq.f32.partialorder %v862, 0.0
        %v911 = vand.u32 %v862, 2147483648
        %v912 = vsel %vm910, %v911, %v909
        %v913 = vrsqrt.pop %v863
        %v914 = vmul.f32 %v863, %v913
        %vm915 = vcmp.eq.f32.partialorder %v863, inf
        %v916 = vsel %vm915, %v863, %v914
        %vm917 = vcmp.eq.f32.partialorder %v863, 0.0
        %v918 = vand.u32 %v863, 2147483648
        %v919 = vsel %vm917, %v918, %v916
        %v920 = vld [vmem:[%s5] sm:$0x1]
        %v921 = vld [vmem:[%s398] sm:$0xff]
        %v922 = vld [vmem:[%s398 + $0x8] sm:$0xff]
        %v923 = vld [vmem:[%s398 + $0x10] sm:$0xff]
        %v924 = vld [vmem:[%s398 + $0x18] sm:$0xff]
        %v925 = vld [vmem:[%s398 + $0x20] sm:$0xff]
        %v926 = vld [vmem:[%s398 + $0x28] sm:$0xff]
        %v927 = vld [vmem:[%s398 + $0x30] sm:$0xff]
        %v928 = vld [vmem:[%s398 + $0x38] sm:$0xff]
        %v929 = vsel %vm430, %v921, %v870
        %v930 = vsel %vm430, %v922, %v877
        %v931 = vsel %vm430, %v923, %v884
        %v932 = vsel %vm430, %v924, %v891
        %v933 = vsel %vm430, %v925, %v898
        %v934 = vsel %vm430, %v926, %v905
        %v935 = vsel %vm430, %v927, %v912
        %v936 = vsel %vm430, %v928, %v919
        %v937 = vld [vmem:[%s3] sm:$0xff]
        %v938 = vld [vmem:[%s3 + $0x8] sm:$0xff]
        %v939 = vld [vmem:[%s3 + $0x10] sm:$0xff]
        %v940 = vld [vmem:[%s3 + $0x18] sm:$0xff]
        %v941 = vld [vmem:[%s3 + $0x20] sm:$0xff]
        %v942 = vld [vmem:[%s3 + $0x28] sm:$0xff]
        %v943 = vld [vmem:[%s3 + $0x30] sm:$0xff]
        %v944 = vld [vmem:[%s3 + $0x38] sm:$0xff]
        %v946 = vlaneseq
        %v947 = vshrl.u32 %v946, 7
        %v948 = vsub.s32 0, %v947
        %v949 = vrot.slane %v920, %v948
        %vm951 = vcmask 523264
        %v953 = vsel %vm951, %v929, 0
        %v956 = vsel %vm951, %v930, 0
        %v959 = vsel %vm951, %v931, 0
        %v962 = vsel %vm951, %v932, 0
        %v965 = vsel %vm951, %v933, 0
        %v968 = vsel %vm951, %v934, 0
        %v971 = vsel %vm951, %v935, 0
        %v974 = vsel %vm951, %v936, 0
        %976 = vmatprep.subr.mxu0 0.0
        %977 = vmatpush1.msra.mxu0 0.0
        %978 = vmatprep.subr.mxu0 0.0
        %979 = vmatpush1.msra.mxu0 0.0
        %980 = vmatprep.subr.mxu0 0.0
        %981 = vmatpush1.msra.mxu0 0.0
        %982 = vmatprep.subr.mxu0 0.0
        %983 = vmatpush1.msra.mxu0 0.0
        %984 = vmatprep.subr.mxu0 0.0
        %985 = vmatpush1.msra.mxu0 0.0
        %986 = vmatprep.subr.mxu0 0.0
        %987 = vmatpush1.msra.mxu0 0.0
        %988 = vmatprep.subr.mxu0 0.0
        %989 = vmatpush1.msra.mxu0 0.0
        %990 = vmatprep.subr.mxu0 0.0
        %991 = vmatpush1.msra.mxu0 0.0
        %992 = vmatprep.subr.mxu0 0.0
        %993 = vmatpush1.msra.mxu0 %v944
        %994 = vmatprep.subr.mxu0 0.0
        %995 = vmatpush1.msra.mxu0 %v943
        %996 = vmatprep.subr.mxu0 0.0
        %997 = vmatpush1.msra.mxu0 %v942
        %998 = vmatprep.subr.mxu0 0.0
        %999 = vmatpush1.msra.mxu0 %v941
        %1000 = vmatprep.subr.mxu0 0.0
        %1001 = vmatpush1.msra.mxu0 %v940
        %1002 = vmatprep.subr.mxu0 0.0
        %1003 = vmatpush1.msra.mxu0 %v939
        %1004 = vmatprep.subr.mxu0 0.0
        %1005 = vmatpush1.msra.mxu0 %v938
        %1006 = vmatprep.subr.mxu0 0.0
        %1007 = vmatpush1.msra.mxu0 %v937
        %1008 = vmatprep.subr.mxu0 0.0
        %1009 = vmatpush2.msra.mxu0 0.0
        %1010 = vmatprep.subr.mxu0 0.0
        %1011 = vmatpush2.msra.mxu0 0.0
        %1012 = vmatprep.subr.mxu0 0.0
        %1013 = vmatpush2.msra.mxu0 0.0
        %1014 = vmatprep.subr.mxu0 0.0
        %1015 = vmatpush2.msra.mxu0 0.0
        %1016 = vmatprep.subr.mxu0 0.0
        %1017 = vmatpush2.msra.mxu0 0.0
        %1018 = vmatprep.subr.mxu0 0.0
        %1019 = vmatpush2.msra.mxu0 0.0
        %1020 = vmatprep.subr.mxu0 0.0
        %1021 = vmatpush2.msra.mxu0 0.0
        %1022 = vmatprep.subr.mxu0 0.0
        %1023 = vmatpush2.msra.mxu0 0.0
        %1024 = vmatprep.subr.mxu0 0.0
        %1025 = vmatpush2.msra.mxu0 0.0
        %1026 = vmatprep.subr.mxu0 0.0
        %1027 = vmatpush2.msra.mxu0 0.0
        %1028 = vmatprep.subr.mxu0 0.0
        %1029 = vmatpush2.msra.mxu0 0.0
        %1030 = vmatprep.subr.mxu0 0.0
        %1031 = vmatpush2.msra.mxu0 0.0
        %1032 = vmatprep.subr.mxu0 0.0
        %1033 = vmatpush2.msra.mxu0 0.0
        %1034 = vmatprep.subr.mxu0 0.0
        %1035 = vmatpush2.msra.mxu0 0.0
        %1036 = vmatprep.subr.mxu0 0.0
        %1037 = vmatpush2.msra.mxu0 0.0
        %1038 = vmatprep.subr.mxu0 0.0
        %1039 = vmatpush2.msra.mxu0 0.0
        %1040 = vmatprep.mubr.f32.mxu0 0.0
        %1041 = vmatmul.mubr.f32.gmra.mxu0 %v953
        %v1042 = vpop.f32.mrf.mxu0
        %v1043 = vadd.f32 %v949, %v1042
        %v1044 = vpop.f32.mrf.mxu0
        %1045 = vmatprep.mubr.f32.mxu0 0.0
        %1046 = vmatmul.mubr.f32.gmra.mxu0 %v956
        %v1047 = vpop.f32.mrf.mxu0
        %v1048 = vadd.f32 %v949, %v1047
        %v1049 = vpop.f32.mrf.mxu0
        %1050 = vmatprep.mubr.f32.mxu0 0.0
        %1051 = vmatmul.mubr.f32.gmra.mxu0 %v959
        %v1052 = vpop.f32.mrf.mxu0
        %v1053 = vadd.f32 %v949, %v1052
        %v1054 = vpop.f32.mrf.mxu0
        %1055 = vmatprep.mubr.f32.mxu0 0.0
        %1056 = vmatmul.mubr.f32.gmra.mxu0 %v962
        %v1057 = vpop.f32.mrf.mxu0
        %v1058 = vadd.f32 %v949, %v1057
        %v1059 = vpop.f32.mrf.mxu0
        %1060 = vmatprep.mubr.f32.mxu0 0.0
        %1061 = vmatmul.mubr.f32.gmra.mxu0 %v965
        %v1062 = vpop.f32.mrf.mxu0
        %v1063 = vadd.f32 %v949, %v1062
        %v1064 = vpop.f32.mrf.mxu0
        %1065 = vmatprep.mubr.f32.mxu0 0.0
        %1066 = vmatmul.mubr.f32.gmra.mxu0 %v968
        %v1067 = vpop.f32.mrf.mxu0
        %v1068 = vadd.f32 %v949, %v1067
        %v1069 = vpop.f32.mrf.mxu0
        %1070 = vmatprep.mubr.f32.mxu0 0.0
        %1071 = vmatmul.mubr.f32.gmra.mxu0 %v971
        %v1072 = vpop.f32.mrf.mxu0
        %v1073 = vadd.f32 %v949, %v1072
        %v1074 = vpop.f32.mrf.mxu0
        %1075 = vmatprep.mubr.f32.mxu0 0.0
        %1076 = vmatmul.mubr.f32.gmra.mxu0 %v974
        %v1077 = vpop.f32.mrf.mxu0
        %v1078 = vadd.f32 %v949, %v1077
        %v1079 = vpop.f32.mrf.mxu0
        %1080 = vdwg.mxu0
        %v1081 = vxor.u32 %v1043, 2147483648
        %v1082 = vxor.u32 %v1048, 2147483648
        %v1083 = vxor.u32 %v1053, 2147483648
        %v1084 = vxor.u32 %v1058, 2147483648
        %v1085 = vxor.u32 %v1063, 2147483648
        %v1086 = vxor.u32 %v1068, 2147483648
        %v1087 = vxor.u32 %v1073, 2147483648
        %v1088 = vxor.u32 %v1078, 2147483648
        %v1089 = vmul.f32 %v1081, 1.442695
        %v1090 = vpow.pop %v1089
        %v1091 = vmul.f32 %v1082, 1.442695
        %v1092 = vpow.pop %v1091
        %v1093 = vmul.f32 %v1083, 1.442695
        %v1094 = vpow.pop %v1093
        %v1095 = vmul.f32 %v1084, 1.442695
        %v1096 = vpow.pop %v1095
        %v1097 = vmul.f32 %v1085, 1.442695
        %v1098 = vpow.pop %v1097
        %v1099 = vmul.f32 %v1086, 1.442695
        %v1100 = vpow.pop %v1099
        %v1101 = vmul.f32 %v1087, 1.442695
        %v1102 = vpow.pop %v1101
        %v1103 = vmul.f32 %v1088, 1.442695
        %v1104 = vpow.pop %v1103
        %v1105 = vadd.f32 %v1090, 1.0
        %v1106 = vadd.f32 %v1092, 1.0
        %v1107 = vadd.f32 %v1094, 1.0
        %v1108 = vadd.f32 %v1096, 1.0
        %v1109 = vadd.f32 %v1098, 1.0
        %v1110 = vadd.f32 %v1100, 1.0
        %v1111 = vadd.f32 %v1102, 1.0
        %v1112 = vadd.f32 %v1104, 1.0
        %v1113 = vrcp.pop %v1105
        %v1114 = vmul.f32 1.0, %v1113
        %v1115 = vrcp.pop %v1106
        %v1116 = vmul.f32 1.0, %v1115
        %v1117 = vrcp.pop %v1107
        %v1118 = vmul.f32 1.0, %v1117
        %v1119 = vrcp.pop %v1108
        %v1120 = vmul.f32 1.0, %v1119
        %v1121 = vrcp.pop %v1109
        %v1122 = vmul.f32 1.0, %v1121
        %v1123 = vrcp.pop %v1110
        %v1124 = vmul.f32 1.0, %v1123
        %v1125 = vrcp.pop %v1111
        %v1126 = vmul.f32 1.0, %v1125
        %v1127 = vrcp.pop %v1112
        %v1128 = vmul.f32 1.0, %v1127
        %v1129 = vmul.f32 %v1043, %v1114
        %v1130 = vmul.f32 %v1048, %v1116
        %v1131 = vmul.f32 %v1053, %v1118
        %v1132 = vmul.f32 %v1058, %v1120
        %v1133 = vmul.f32 %v1063, %v1122
        %v1134 = vmul.f32 %v1068, %v1124
        %v1135 = vmul.f32 %v1073, %v1126
        %v1136 = vmul.f32 %v1078, %v1128
        %v1137 = vld [vmem:[%s4] sm:$0xff]
        %v1138 = vld [vmem:[%s4 + $0x8] sm:$0xff]
        %v1139 = vld [vmem:[%s4 + $0x10] sm:$0xff]
        %v1140 = vld [vmem:[%s4 + $0x18] sm:$0xff]
        %1141 = vrot.lane.b32.xlu0 %v949, 96
        %v1142 = vpop.permute.xlu0 %1141
        %v1145 = vsel %vm430, %v1129, 0
        %v1148 = vsel %vm430, %v1130, 0
        %v1151 = vsel %vm430, %v1131, 0
        %v1154 = vsel %vm430, %v1132, 0
        %v1157 = vsel %vm430, %v1133, 0
        %v1160 = vsel %vm430, %v1134, 0
        %v1163 = vsel %vm430, %v1135, 0
        %v1166 = vsel %vm430, %v1136, 0
        %1168 = vmatprep.subr.mxu0 0.0
        %1169 = vmatpush1.msra.mxu0 0.0
        %1170 = vmatprep.subr.mxu0 0.0
        %1171 = vmatpush1.msra.mxu0 0.0
        %1172 = vmatprep.subr.mxu0 0.0
        %1173 = vmatpush1.msra.mxu0 0.0
        %1174 = vmatprep.subr.mxu0 0.0
        %1175 = vmatpush1.msra.mxu0 0.0
        %1176 = vmatprep.subr.mxu0 0.0
        %1177 = vmatpush1.msra.mxu0 0.0
        %1178 = vmatprep.subr.mxu0 0.0
        %1179 = vmatpush1.msra.mxu0 0.0
        %1180 = vmatprep.subr.mxu0 0.0
        %1181 = vmatpush1.msra.mxu0 0.0
        %1182 = vmatprep.subr.mxu0 0.0
        %1183 = vmatpush1.msra.mxu0 0.0
        %1184 = vmatprep.subr.mxu0 0.0
        %1185 = vmatpush1.msra.mxu0 0.0
        %1186 = vmatprep.subr.mxu0 0.0
        %1187 = vmatpush1.msra.mxu0 0.0
        %1188 = vmatprep.subr.mxu0 0.0
        %1189 = vmatpush1.msra.mxu0 0.0
        %1190 = vmatprep.subr.mxu0 0.0
        %1191 = vmatpush1.msra.mxu0 0.0
        %1192 = vmatprep.subr.mxu0 0.0
        %1193 = vmatpush1.msra.mxu0 %v1140
        %1194 = vmatprep.subr.mxu0 0.0
        %1195 = vmatpush1.msra.mxu0 %v1139
        %1196 = vmatprep.subr.mxu0 0.0
        %1197 = vmatpush1.msra.mxu0 %v1138
        %1198 = vmatprep.subr.mxu0 0.0
        %1199 = vmatpush1.msra.mxu0 %v1137
        %1200 = vmatprep.subr.mxu0 0.0
        %1201 = vmatpush2.msra.mxu0 0.0
        %1202 = vmatprep.subr.mxu0 0.0
        %1203 = vmatpush2.msra.mxu0 0.0
        %1204 = vmatprep.subr.mxu0 0.0
        %1205 = vmatpush2.msra.mxu0 0.0
        %1206 = vmatprep.subr.mxu0 0.0
        %1207 = vmatpush2.msra.mxu0 0.0
        %1208 = vmatprep.subr.mxu0 0.0
        %1209 = vmatpush2.msra.mxu0 0.0
        %1210 = vmatprep.subr.mxu0 0.0
        %1211 = vmatpush2.msra.mxu0 0.0
        %1212 = vmatprep.subr.mxu0 0.0
        %1213 = vmatpush2.msra.mxu0 0.0
        %1214 = vmatprep.subr.mxu0 0.0
        %1215 = vmatpush2.msra.mxu0 0.0
        %1216 = vmatprep.subr.mxu0 0.0
        %1217 = vmatpush2.msra.mxu0 0.0
        %1218 = vmatprep.subr.mxu0 0.0
        %1219 = vmatpush2.msra.mxu0 0.0
        %1220 = vmatprep.subr.mxu0 0.0
        %1221 = vmatpush2.msra.mxu0 0.0
        %1222 = vmatprep.subr.mxu0 0.0
        %1223 = vmatpush2.msra.mxu0 0.0
        %1224 = vmatprep.subr.mxu0 0.0
        %1225 = vmatpush2.msra.mxu0 0.0
        %1226 = vmatprep.subr.mxu0 0.0
        %1227 = vmatpush2.msra.mxu0 0.0
        %1228 = vmatprep.subr.mxu0 0.0
        %1229 = vmatpush2.msra.mxu0 0.0
        %1230 = vmatprep.subr.mxu0 0.0
        %1231 = vmatpush2.msra.mxu0 0.0
        %1232 = vmatprep.mubr.f32.mxu0 0.0
        %1233 = vmatmul.mubr.f32.gmra.mxu0 %v1145
        %v1234 = vpop.f32.mrf.mxu0
        %v1235 = vadd.f32 %v1142, %v1234
        %v1236 = vpop.f32.mrf.mxu0
        %1237 = vmatprep.mubr.f32.mxu0 0.0
        %1238 = vmatmul.mubr.f32.gmra.mxu0 %v1148
        %v1239 = vpop.f32.mrf.mxu0
        %v1240 = vadd.f32 %v1142, %v1239
        %v1241 = vpop.f32.mrf.mxu0
        %1242 = vmatprep.mubr.f32.mxu0 0.0
        %1243 = vmatmul.mubr.f32.gmra.mxu0 %v1151
        %v1244 = vpop.f32.mrf.mxu0
        %v1245 = vadd.f32 %v1142, %v1244
        %v1246 = vpop.f32.mrf.mxu0
        %1247 = vmatprep.mubr.f32.mxu0 0.0
        %1248 = vmatmul.mubr.f32.gmra.mxu0 %v1154
        %v1249 = vpop.f32.mrf.mxu0
        %v1250 = vadd.f32 %v1142, %v1249
        %v1251 = vpop.f32.mrf.mxu0
        %1252 = vmatprep.mubr.f32.mxu0 0.0
        %1253 = vmatmul.mubr.f32.gmra.mxu0 %v1157
        %v1254 = vpop.f32.mrf.mxu0
        %v1255 = vadd.f32 %v1142, %v1254
        %v1256 = vpop.f32.mrf.mxu0
        %1257 = vmatprep.mubr.f32.mxu0 0.0
        %1258 = vmatmul.mubr.f32.gmra.mxu0 %v1160
        %v1259 = vpop.f32.mrf.mxu0
        %v1260 = vadd.f32 %v1142, %v1259
        %v1261 = vpop.f32.mrf.mxu0
        %1262 = vmatprep.mubr.f32.mxu0 0.0
        %1263 = vmatmul.mubr.f32.gmra.mxu0 %v1163
        %v1264 = vpop.f32.mrf.mxu0
        %v1265 = vadd.f32 %v1142, %v1264
        %v1266 = vpop.f32.mrf.mxu0
        %1267 = vmatprep.mubr.f32.mxu0 0.0
        %1268 = vmatmul.mubr.f32.gmra.mxu0 %v1166
        %v1269 = vpop.f32.mrf.mxu0
        %v1270 = vadd.f32 %v1142, %v1269
        %v1271 = vpop.f32.mrf.mxu0
        %1272 = vdwg.mxu0
        %1281 = vrot.lane.b32.xlu0 %v816, 32
        %v1282 = vpop.permute.xlu0 %1281
        %1283 = vrot.lane.b32.xlu0 %v817, 32
        %v1284 = vpop.permute.xlu0 %1283
        %1285 = vrot.lane.b32.xlu0 %v818, 32
        %v1286 = vpop.permute.xlu0 %1285
        %1287 = vrot.lane.b32.xlu0 %v819, 32
        %v1288 = vpop.permute.xlu0 %1287
        %1289 = vrot.lane.b32.xlu0 %v820, 32
        %v1290 = vpop.permute.xlu0 %1289
        %1291 = vrot.lane.b32.xlu0 %v821, 32
        %v1292 = vpop.permute.xlu0 %1291
        %1293 = vrot.lane.b32.xlu0 %v822, 32
        %v1294 = vpop.permute.xlu0 %1293
        %1295 = vrot.lane.b32.xlu0 %v823, 32
        %v1296 = vpop.permute.xlu0 %1295
        %v1305 = vmul.f32 %v1235, %v1282
        %v1306 = vmul.f32 %v1240, %v1284
        %v1307 = vmul.f32 %v1245, %v1286
        %v1308 = vmul.f32 %v1250, %v1288
        %v1309 = vmul.f32 %v1255, %v1290
        %v1310 = vmul.f32 %v1260, %v1292
        %v1311 = vmul.f32 %v1265, %v1294
        %v1312 = vmul.f32 %v1270, %v1296
        %1321 = vrot.lane.b32.xlu0 %v1235, 96
        %v1322 = vpop.permute.xlu0 %1321
        %1323 = vrot.lane.b32.xlu0 %v1240, 96
        %v1324 = vpop.permute.xlu0 %1323
        %1325 = vrot.lane.b32.xlu0 %v1245, 96
        %v1326 = vpop.permute.xlu0 %1325
        %1327 = vrot.lane.b32.xlu0 %v1250, 96
        %v1328 = vpop.permute.xlu0 %1327
        %1329 = vrot.lane.b32.xlu0 %v1255, 96
        %v1330 = vpop.permute.xlu0 %1329
        %1331 = vrot.lane.b32.xlu0 %v1260, 96
        %v1332 = vpop.permute.xlu0 %1331
        %1333 = vrot.lane.b32.xlu0 %v1265, 96
        %v1334 = vpop.permute.xlu0 %1333
        %1335 = vrot.lane.b32.xlu0 %v1270, 96
        %v1336 = vpop.permute.xlu0 %1335
        %v1345 = vadd.f32 %v1305, %v1322
        %v1346 = vadd.f32 %v1306, %v1324
        %v1347 = vadd.f32 %v1307, %v1326
        %v1348 = vadd.f32 %v1308, %v1328
        %v1349 = vadd.f32 %v1309, %v1330
        %v1350 = vadd.f32 %v1310, %v1332
        %v1351 = vadd.f32 %v1311, %v1334
        %v1352 = vadd.f32 %v1312, %v1336
        %v1353 = vmul.f32 %v402, %v1235
        %v1354 = vmul.f32 %v403, %v1240
        %v1355 = vmul.f32 %v404, %v1245
        %v1356 = vmul.f32 %v405, %v1250
        %v1357 = vmul.f32 %v406, %v1255
        %v1358 = vmul.f32 %v407, %v1260
        %v1359 = vmul.f32 %v408, %v1265
        %v1360 = vmul.f32 %v409, %v1270
        %v1361 = vmul.f32 %v410, %v1235
        %v1362 = vmul.f32 %v411, %v1240
        %v1363 = vmul.f32 %v412, %v1245
        %v1364 = vmul.f32 %v413, %v1250
        %v1365 = vmul.f32 %v414, %v1255
        %v1366 = vmul.f32 %v415, %v1260
        %v1367 = vmul.f32 %v416, %v1265
        %v1368 = vmul.f32 %v417, %v1270
        %v1369 = vmul.f32 %v418, %v1235
        %v1370 = vmul.f32 %v419, %v1240
        %v1371 = vmul.f32 %v420, %v1245
        %v1372 = vmul.f32 %v421, %v1250
        %v1373 = vmul.f32 %v422, %v1255
        %v1374 = vmul.f32 %v423, %v1260
        %v1375 = vmul.f32 %v424, %v1265
        %v1376 = vmul.f32 %v425, %v1270
        %1385 = vrot.lane.b32.xlu0 %v1345, 96
        %v1386 = vpop.permute.xlu0 %1385
        %1387 = vrot.lane.b32.xlu0 %v1346, 96
        %v1388 = vpop.permute.xlu0 %1387
        %1389 = vrot.lane.b32.xlu0 %v1347, 96
        %v1390 = vpop.permute.xlu0 %1389
        %1391 = vrot.lane.b32.xlu0 %v1348, 96
        %v1392 = vpop.permute.xlu0 %1391
        %1393 = vrot.lane.b32.xlu0 %v1349, 96
        %v1394 = vpop.permute.xlu0 %1393
        %1395 = vrot.lane.b32.xlu0 %v1350, 96
        %v1396 = vpop.permute.xlu0 %1395
        %1397 = vrot.lane.b32.xlu0 %v1351, 96
        %v1398 = vpop.permute.xlu0 %1397
        %1399 = vrot.lane.b32.xlu0 %v1352, 96
        %v1400 = vpop.permute.xlu0 %1399
        %1417 = vrot.lane.b32.xlu0 %v1353, 32
        %v1418 = vpop.permute.xlu0 %1417
        %1419 = vrot.lane.b32.xlu0 %v1354, 32
        %v1420 = vpop.permute.xlu0 %1419
        %1421 = vrot.lane.b32.xlu0 %v1355, 32
        %v1422 = vpop.permute.xlu0 %1421
        %1423 = vrot.lane.b32.xlu0 %v1356, 32
        %v1424 = vpop.permute.xlu0 %1423
        %1425 = vrot.lane.b32.xlu0 %v1357, 32
        %v1426 = vpop.permute.xlu0 %1425
        %1427 = vrot.lane.b32.xlu0 %v1358, 32
        %v1428 = vpop.permute.xlu0 %1427
        %1429 = vrot.lane.b32.xlu0 %v1359, 32
        %v1430 = vpop.permute.xlu0 %1429
        %1431 = vrot.lane.b32.xlu0 %v1360, 32
        %v1432 = vpop.permute.xlu0 %1431
        %1449 = vrot.lane.b32.xlu0 %v1361, 64
        %v1450 = vpop.permute.xlu0 %1449
        %1451 = vrot.lane.b32.xlu0 %v1362, 64
        %v1452 = vpop.permute.xlu0 %1451
        %1453 = vrot.lane.b32.xlu0 %v1363, 64
        %v1454 = vpop.permute.xlu0 %1453
        %1455 = vrot.lane.b32.xlu0 %v1364, 64
        %v1456 = vpop.permute.xlu0 %1455
        %1457 = vrot.lane.b32.xlu0 %v1365, 64
        %v1458 = vpop.permute.xlu0 %1457
        %1459 = vrot.lane.b32.xlu0 %v1366, 64
        %v1460 = vpop.permute.xlu0 %1459
        %1461 = vrot.lane.b32.xlu0 %v1367, 64
        %v1462 = vpop.permute.xlu0 %1461
        %1463 = vrot.lane.b32.xlu0 %v1368, 64
        %v1464 = vpop.permute.xlu0 %1463
        %1481 = vrot.lane.b32.xlu0 %v1369, 96
        %v1482 = vpop.permute.xlu0 %1481
        %1483 = vrot.lane.b32.xlu0 %v1370, 96
        %v1484 = vpop.permute.xlu0 %1483
        %1485 = vrot.lane.b32.xlu0 %v1371, 96
        %v1486 = vpop.permute.xlu0 %1485
        %1487 = vrot.lane.b32.xlu0 %v1372, 96
        %v1488 = vpop.permute.xlu0 %1487
        %1489 = vrot.lane.b32.xlu0 %v1373, 96
        %v1490 = vpop.permute.xlu0 %1489
        %1491 = vrot.lane.b32.xlu0 %v1374, 96
        %v1492 = vpop.permute.xlu0 %1491
        %1493 = vrot.lane.b32.xlu0 %v1375, 96
        %v1494 = vpop.permute.xlu0 %1493
        %1495 = vrot.lane.b32.xlu0 %v1376, 96
        %v1496 = vpop.permute.xlu0 %1495
        %v1505 = vsel %vm430, %v1386, %v1418
        %v1506 = vsel %vm430, %v1388, %v1420
        %v1507 = vsel %vm430, %v1390, %v1422
        %v1508 = vsel %vm430, %v1392, %v1424
        %v1509 = vsel %vm430, %v1394, %v1426
        %v1510 = vsel %vm430, %v1396, %v1428
        %v1511 = vsel %vm430, %v1398, %v1430
        %v1512 = vsel %vm430, %v1400, %v1432
        %v1513 = vsel %vm951, %v1505, %v1450
        %v1514 = vsel %vm951, %v1506, %v1452
        %v1515 = vsel %vm951, %v1507, %v1454
        %v1516 = vsel %vm951, %v1508, %v1456
        %v1517 = vsel %vm951, %v1509, %v1458
        %v1518 = vsel %vm951, %v1510, %v1460
        %v1519 = vsel %vm951, %v1511, %v1462
        %v1520 = vsel %vm951, %v1512, %v1464
        %vm1521 = vcmask 785408
        %v1522 = vsel %vm1521, %v1513, %v1482
        %v1523 = vsel %vm1521, %v1514, %v1484
        %v1524 = vsel %vm1521, %v1515, %v1486
        %v1525 = vsel %vm1521, %v1516, %v1488
        %v1526 = vsel %vm1521, %v1517, %v1490
        %v1527 = vsel %vm1521, %v1518, %v1492
        %v1528 = vsel %vm1521, %v1519, %v1494
        %v1529 = vsel %vm1521, %v1520, %v1496
        %1530 = vst [vmem:[%s393] sm:$0xff] %v1522
        %1531 = vst [vmem:[%s393 + $0x8] sm:$0xff] %v1523
        %1532 = vst [vmem:[%s393 + $0x10] sm:$0xff] %v1524
        %1533 = vst [vmem:[%s393 + $0x18] sm:$0xff] %v1525
        %1534 = vst [vmem:[%s393 + $0x20] sm:$0xff] %v1526
        %1535 = vst [vmem:[%s393 + $0x28] sm:$0xff] %v1527
        %1536 = vst [vmem:[%s393 + $0x30] sm:$0xff] %v1528
        %1537 = vst [vmem:[%s393 + $0x38] sm:$0xff] %v1529
        %s1538 = sand.u32 %s164, 1
        %s1539 = scalar_lea.sflag [#allocation4], %s1538
        %s1540 = sand.u32 %s164, 1
        %s1541 = smul.addr %s1540, 64
        %s1542 = scalar_lea.vmem [#allocation3], %s1541
        // Predicated region
        $region83: #{update_painn.1} parent=77 // pred_check
          %p1543 = pneg %p174
        $region84: #{update_painn.1} parent=77 // pred_check_branch
          %1545 = sbr.rel (%p1543) target = $region86
        $region85: #{update_painn.1} parent=77 // pred_region
          %s1546 = smul.u32 8, %s20
          %s1548 = ssub.s32 1024, 1024
          %1549 = vsyncadd %s1539, %s1548
          %s1550 = smul.addr %s1546, 128
          %s1551 = scalar_lea.hbm %s6, %s1550
          %s1552 = sshll.u32 %s1542, 4
          %s1553 = int_to_ptr.vmem [resolvable:$true] %s1552
          %1558 = dma.vmem_to_hbm [thread:$0]  %s1553, 1024, %s1551, %s1539, 128, 128, 8
        $region86: #{update_painn.1} parent=77 // pred_fallthru
          _
      $region78: #{update_painn.1} parent=5 // pred_fallthru
        _
      %p1559 = scmp.le.s32.totalorder 2, %s15
      // Predicated region
      $region87: #{update_painn.1} parent=5 // pred_check
        %p1560 = pneg %p1559
      $region88: #{update_painn.1} parent=5 // pred_check_branch
        %1562 = sbr.rel (%p1560) target = $region90
      $region89: #{update_painn.1} parent=5 // pred_region
        %s1563 = ssub.s32 %s15, 2
        // Predicated region
        $region91: #{update_painn.1} parent=89 // pred_check
          %p1564 = pneg %p180
        $region92: #{update_painn.1} parent=89 // pred_check_branch
          %1566 = sbr.rel (%p1564) target = $region94
        $region93: #{update_painn.1} parent=89 // pred_region
          %s1567 = sand.u32 %s165, 1
          %s1568 = scalar_lea.sflag [#allocation4], %s1567
          %s1569 = sand.u32 %s165, 1
          %s1570 = smul.addr %s1569, 64
          %s1571 = scalar_lea.vmem [#allocation3], %s1570
          %1572 = dma.done %s1568, 1024
        $region94: #{update_painn.1} parent=89 // pred_fallthru
          _
      $region90: #{update_painn.1} parent=5 // pred_fallthru
        _
    $region6: #{update_painn.1} parent=1 // loop_footer
      %s19 = sadd.s32 1, %s15
    $region7: #{update_painn.1} parent=1 // loop_footer_branch
      %14 = sbr.rel target = $region3
    $region8: #{update_painn.1} parent=1 // loop_exit
      _
    %1573 = vsyncpa [#allocation4], 1
    %s1574 = scalar_lea.sflag [#allocation4], 1
    %1575 = vsyncpa %s1574, 1

</llo_original>
